<compile_context>
chip_gen: v6e
topology: v6e:2x2x1
jax: 0.10.0
libtpu: 0.0.40
codegen_flags: <defaults>
</compile_context>

<pallas_src>
import functools
import itertools

import jax
import jax.numpy as jnp
import numpy as np
from jax.experimental import pallas as pl
from jax.experimental.pallas import tpu as pltpu

_BN_EPS = 1e-5
_LRELU_SLOPE = 0.2
_LANE = 128


def _round_up(x, m):
    return (x + m - 1) // m * m


# --------- pass 1: conv matmul + per-channel sum / sum-of-squares -----------
def _conv_stats_kernel(p_ref, w_ref, y_ref, stats_ref):
    i = pl.program_id(0)

    @pl.when(i == 0)
    def _init():
        stats_ref[...] = jnp.zeros_like(stats_ref)

    # MXU matmul, f32 accumulation regardless of operand dtype.
    y = jnp.dot(p_ref[...], w_ref[...], preferred_element_type=jnp.float32)
    y_ref[...] = y

    # Per-tile partial BN statistics (cross-sublane reduce -> XLU slot).
    # stats row 0 = sum(y), row 1 = sum(y*y); combined across ALL M tiles via
    # the resident (constant-index) output block over the "arbitrary" M axis.
    stats_ref[0:1, :] += jnp.sum(y, axis=0, keepdims=True)
    stats_ref[1:2, :] += jnp.sum(y * y, axis=0, keepdims=True)


# --------- pass 2: normalize with precomputed scale/shift + LeakyReLU -------
def _bn_lrelu_kernel(y_ref, scale_ref, shift_ref, o_ref):
    z = y_ref[...] * scale_ref[...] + shift_ref[...]
    o_ref[...] = jnp.where(z >= 0, z, _LRELU_SLOPE * z)


def conv_bn_layer(x, weight, bias, gamma, beta, *, stride=1, padding=1,
                  block_m=512, matmul_dtype=jnp.float32):
    """Conv3d + BatchNorm3d(batch statistics) + LeakyReLU(0.2).

    x: (N, Cin, D, H, W); weight: (Cout, Cin, kd, kh, kw).
    `bias` is accepted for API parity with nn.Conv3d but unused: training-mode
    BN mean-subtraction cancels it exactly.
    `matmul_dtype=jnp.bfloat16` halves DMA bytes / boosts MXU rate on v6e/v7x;
    all BN / activation math stays f32 (v5e-safe).
    Returns NCDHW output (same layout as the PyTorch module).
    """
    del bias  # exactly cancelled by batch-stat mean subtraction
    N, Cin, D, H, W = x.shape
    Cout, _, kd, kh, kw = weight.shape
    s, p = stride, padding

    Do = (D + 2 * p - kd) // s + 1
    Ho = (H + 2 * p - kh) // s + 1
    Wo = (W + 2 * p - kw) // s + 1

    M = N * Do * Ho * Wo
    K = Cin * kd * kh * kw
    K_pad = _round_up(K, _LANE)
    C_pad = _round_up(Cout, _LANE)

    mt = min(block_m, _round_up(M, 8))
    mt = max(8, (mt // 8) * 8)
    n_tiles = (M + mt - 1) // mt
    M_pad = n_tiles * mt

    # --- im2col (host-side glue). k-ordering matches weight.reshape(Cout,-1):
    #     k = cin*(kd*kh*kw) + (i*kh*kw + j*kw + l)
    # TODO(synk): replace the host-side im2col with an in-kernel
    # shift-and-accumulate over kernel taps (extra trailing "arbitrary" grid
    # axis) so the input is read ~once instead of kvol times through HBM.
    xp = jnp.pad(x.astype(jnp.float32),
                 ((0, 0), (0, 0), (p, p), (p, p), (p, p)))
    slabs = []
    for i, j, l in itertools.product(range(kd), range(kh), range(kw)):
        slabs.append(
            xp[:, :,
               i:i + (Do - 1) * s + 1:s,
               j:j + (Ho - 1) * s + 1:s,
               l:l + (Wo - 1) * s + 1:s])
    patches = jnp.stack(slabs, axis=2)               # (N, Cin, kvol, Do, Ho, Wo)
    patches = patches.transpose(0, 3, 4, 5, 1, 2)    # (N, Do, Ho, Wo, Cin, kvol)
    patches = patches.reshape(M, K)
    patches = jnp.pad(patches, ((0, M_pad - M), (0, K_pad - K)))
    patches = patches.astype(matmul_dtype)

    w2 = weight.reshape(Cout, K).T.astype(jnp.float32)          # (K, Cout)
    w2 = jnp.pad(w2, ((0, K_pad - K), (0, C_pad - Cout))).astype(matmul_dtype)

    # ---- pass 1: tiled conv matmul + per-channel sum / sumsq ---------------
    y, stats = pl.pallas_call(
        _conv_stats_kernel,
        out_shape=(jax.ShapeDtypeStruct((M_pad, C_pad), jnp.float32),
                   jax.ShapeDtypeStruct((8, C_pad), jnp.float32)),
        grid=(n_tiles,),
        in_specs=[
            pl.BlockSpec((mt, K_pad), lambda i: (i, 0)),
            pl.BlockSpec((K_pad, C_pad), lambda i: (0, 0)),
        ],
        out_specs=(
            pl.BlockSpec((mt, C_pad), lambda i: (i, 0)),
            pl.BlockSpec((8, C_pad), lambda i: (0, 0)),     # resident accumulator
        ),
        compiler_params=pltpu.CompilerParams(
            dimension_semantics=("arbitrary",)),
    )(patches, w2)

    # ---- tiny per-channel reduction -> fused scale/shift (O(C), plain JAX) -
    # Single-pass E[y^2]-E[y]^2 in f32; values are O(1) so cancellation is
    # negligible at these magnitudes.
    count = jnp.float32(M)                 # zero-padded rows contribute exactly 0
    mean = stats[0:1, :] / count
    var = jnp.maximum(stats[1:2, :] / count - mean * mean, 0.0)
    inv = jax.lax.rsqrt(var + _BN_EPS)
    gamma_p = jnp.pad(gamma.astype(jnp.float32).reshape(1, Cout),
                      ((0, 0), (0, C_pad - Cout)))
    beta_p = jnp.pad(beta.astype(jnp.float32).reshape(1, Cout),
                     ((0, 0), (0, C_pad - Cout)))
    scale = gamma_p * inv                  # (1, C_pad)
    shift = beta_p - mean * scale          # (1, C_pad)

    # ---- pass 2: normalize + LeakyReLU over independent M tiles ------------
    out = pl.pallas_call(
        _bn_lrelu_kernel,
        out_shape=jax.ShapeDtypeStruct((M_pad, C_pad), jnp.float32),
        grid=(n_tiles,),
        in_specs=[
            pl.BlockSpec((mt, C_pad), lambda i: (i, 0)),
            pl.BlockSpec((1, C_pad), lambda i: (0, 0)),
            pl.BlockSpec((1, C_pad), lambda i: (0, 0)),
        ],
        out_specs=pl.BlockSpec((mt, C_pad), lambda i: (i, 0)),
        compiler_params=pltpu.CompilerParams(
            dimension_semantics=("parallel",)),
    )(y, scale, shift)

    out = out[:M, :Cout].reshape(N, Do, Ho, Wo, Cout)
    # Back to NCDHW to preserve the PyTorch module's output layout.
    return out.transpose(0, 4, 1, 2, 3)


def _reference(x, weight, bias, gamma, beta, *, stride=1, padding=1):
    y = jax.lax.conv_general_dilated(
        x.astype(jnp.float32), weight.astype(jnp.float32),
        window_strides=(stride,) * 3,
        padding=[(padding, padding)] * 3,
        dimension_numbers=("NCDHW", "OIDHW", "NCDHW"),
        precision=jax.lax.Precision.HIGHEST,
    )
    y = y + bias.reshape(1, -1, 1, 1, 1)
    mean = y.mean(axis=(0, 2, 3, 4), keepdims=True)
    var = jnp.square(y - mean).mean(axis=(0, 2, 3, 4), keepdims=True)
    z = (y - mean) * jax.lax.rsqrt(var + _BN_EPS)
    z = z * gamma.reshape(1, -1, 1, 1, 1) + beta.reshape(1, -1, 1, 1, 1)
    return jnp.where(z >= 0, z, _LRELU_SLOPE * z)


if __name__ == "__main__":
    key = jax.random.PRNGKey(0)
    k_x, k_w, k_b, k_g, k_be = jax.random.split(key, 5)

    N, Cin, Cout = 2, 4, 8
    D = H = W = 8
    ksize, stride, padding = 3, 1, 1

    x = jax.random.normal(k_x, (N, Cin, D, H, W), dtype=jnp.float32)
    weight = 0.1 * jax.random.normal(
        k_w, (Cout, Cin, ksize, ksize, ksize), dtype=jnp.float32)
    bias = 0.1 * jax.random.normal(k_b, (Cout,), dtype=jnp.float32)
    gamma = 1.0 + 0.1 * jax.random.normal(k_g, (Cout,), dtype=jnp.float32)
    beta = 0.1 * jax.random.normal(k_be, (Cout,), dtype=jnp.float32)

    fwd = jax.jit(functools.partial(conv_bn_layer, stride=stride, padding=padding))
    out = jax.block_until_ready(fwd(x, weight, bias, gamma, beta))

    ref = jax.block_until_ready(
        _reference(x, weight, bias, gamma, beta, stride=stride, padding=padding))

    assert out.shape == (N, Cout, D, H, W), out.shape
    if not np.allclose(np.asarray(out), np.asarray(ref), atol=1e-2, rtol=1e-2):
        raise AssertionError("Pallas kernel output mismatch vs reference")

    print("KERNEL_OK")
</pallas_src>

<mosaic_0001>
module attributes {stable_mosaic.version = 11 : i64} {
  func.func @_conv_stats_kernel(%arg0: i32, %arg1: memref<512x128xf32, #tpu.memory_space<vmem>>, %arg2: memref<128x128xf32, #tpu.memory_space<vmem>>, %arg3: memref<512x128xf32, #tpu.memory_space<vmem>>, %arg4: memref<8x128xf32, #tpu.memory_space<vmem>>) attributes {dimension_semantics = [#tpu.dimension_semantics<arbitrary>], iteration_bounds = array<i64: 2>, scalar_prefetch = 0 : i64, scratch_operands = 0 : i64, tpu.core_type = #tpu.core_type<tc>, window_params = [{transform_indices = @transform_0, window_bounds = array<i64: 512, 128>}, {pipeline_mode = #tpu.pipeline_mode<synchronous>, transform_indices = @transform_1, window_bounds = array<i64: 128, 128>}, {transform_indices = @transform_2, window_bounds = array<i64: 512, 128>}, {pipeline_mode = #tpu.pipeline_mode<synchronous>, transform_indices = @transform_3, window_bounds = array<i64: 8, 128>}]} {
    %c0_i32 = arith.constant 0 : i32
    %0 = arith.cmpi eq, %arg0, %c0_i32 : i32
    %1 = arith.extui %0 : i1 to i32
    %c0_i32_0 = arith.constant 0 : i32
    %2 = arith.cmpi ne, %1, %c0_i32_0 : i32
    scf.if %2 {
      %cst_15 = arith.constant 0.000000e+00 : f32
      %18 = vector.broadcast %cst_15 : f32 to vector<8x128xf32>
      %c0_16 = arith.constant 0 : index
      %c0_17 = arith.constant 0 : index
      %19 = vector.load %arg4[%c0_16, %c0_17] : memref<8x128xf32, #tpu.memory_space<vmem>>, vector<8x128xf32>
      tpu.vector_store %arg4[%c0_16, %c0_17], %18 {strides = array<i32>} : memref<8x128xf32, #tpu.memory_space<vmem>>, vector<8x128xf32>,
    } else {
    }
    %c0 = arith.constant 0 : index
    %c0_1 = arith.constant 0 : index
    %3 = vector.load %arg1[%c0, %c0_1] : memref<512x128xf32, #tpu.memory_space<vmem>>, vector<512x128xf32>
    %c0_2 = arith.constant 0 : index
    %c0_3 = arith.constant 0 : index
    %4 = vector.load %arg2[%c0_2, %c0_3] : memref<128x128xf32, #tpu.memory_space<vmem>>, vector<128x128xf32>
    %cst = arith.constant dense<0.000000e+00> : vector<512x128xf32>
    %5 = tpu.matmul %3, %4, %cst {dimension_numbers = #tpu.dot_dimension_numbers<[1], [0], [0], [1], [0, 0, 1, 1], [], []>} : vector<512x128xf32>, vector<128x128xf32>, vector<512x128xf32> -> vector<512x128xf32>
    %c0_4 = arith.constant 0 : index
    %c0_5 = arith.constant 0 : index
    %6 = vector.load %arg3[%c0_4, %c0_5] : memref<512x128xf32, #tpu.memory_space<vmem>>, vector<512x128xf32>
    tpu.vector_store %arg3[%c0_4, %c0_5], %5 {strides = array<i32>} : memref<512x128xf32, #tpu.memory_space<vmem>>, vector<512x128xf32>,
    %c0_6 = arith.constant 0 : index
    %c0_7 = arith.constant 0 : index
    %7 = vector.load %arg4[%c0_6, %c0_7] : memref<8x128xf32, #tpu.memory_space<vmem>>, vector<1x128xf32>
    %cst_8 = arith.constant dense<0.000000e+00> : vector<128xf32>
    %8 = vector.multi_reduction <add>, %5, %cst_8 [0] : vector<512x128xf32> to vector<128xf32>
    %9 = vector.shape_cast %8 : vector<128xf32> to vector<1x128xf32>
    %10 = arith.addf %7, %9 : vector<1x128xf32>
    %c0_9 = arith.constant 0 : index
    %c0_10 = arith.constant 0 : index
    %11 = vector.load %arg4[%c0_9, %c0_10] : memref<8x128xf32, #tpu.memory_space<vmem>>, vector<1x128xf32>
    tpu.vector_store %arg4[%c0_9, %c0_10], %10 {strides = array<i32>} : memref<8x128xf32, #tpu.memory_space<vmem>>, vector<1x128xf32>,
    %c1 = arith.constant 1 : index
    %c0_11 = arith.constant 0 : index
    %12 = vector.load %arg4[%c1, %c0_11] : memref<8x128xf32, #tpu.memory_space<vmem>>, vector<1x128xf32>
    %13 = arith.mulf %5, %5 : vector<512x128xf32>
    %cst_12 = arith.constant dense<0.000000e+00> : vector<128xf32>
    %14 = vector.multi_reduction <add>, %13, %cst_12 [0] : vector<512x128xf32> to vector<128xf32>
    %15 = vector.shape_cast %14 : vector<128xf32> to vector<1x128xf32>
    %16 = arith.addf %12, %15 : vector<1x128xf32>
    %c1_13 = arith.constant 1 : index
    %c0_14 = arith.constant 0 : index
    %17 = vector.load %arg4[%c1_13, %c0_14] : memref<8x128xf32, #tpu.memory_space<vmem>>, vector<1x128xf32>
    tpu.vector_store %arg4[%c1_13, %c0_14], %16 {strides = array<i32>} : memref<8x128xf32, #tpu.memory_space<vmem>>, vector<1x128xf32>,
    return
  }
  func.func @transform_0(%arg0: i32) -> (i32, i32) {
    %c0_i32 = arith.constant 0 : i32
    %c0_i32_0 = arith.constant 0 : i32
    return %arg0, %c0_i32 : i32, i32
  }
  func.func @transform_1(%arg0: i32) -> (i32, i32) {
    %c0_i32 = arith.constant 0 : i32
    %c0_i32_0 = arith.constant 0 : i32
    %c0_i32_1 = arith.constant 0 : i32
    return %c0_i32, %c0_i32_0 : i32, i32
  }
  func.func @transform_2(%arg0: i32) -> (i32, i32) {
    %c0_i32 = arith.constant 0 : i32
    %c0_i32_0 = arith.constant 0 : i32
    return %arg0, %c0_i32 : i32, i32
  }
  func.func @transform_3(%arg0: i32) -> (i32, i32) {
    %c0_i32 = arith.constant 0 : i32
    %c0_i32_0 = arith.constant 0 : i32
    %c0_i32_1 = arith.constant 0 : i32
    return %c0_i32, %c0_i32_0 : i32, i32
  }
}

module attributes {stable_mosaic.version = 11 : i64} {
  func.func @_bn_lrelu_kernel(%arg0: i32, %arg1: memref<512x128xf32, #tpu.memory_space<vmem>>, %arg2: memref<1x128xf32, #tpu.memory_space<vmem>>, %arg3: memref<1x128xf32, #tpu.memory_space<vmem>>, %arg4: memref<512x128xf32, #tpu.memory_space<vmem>>) attributes {dimension_semantics = [#tpu.dimension_semantics<parallel>], iteration_bounds = array<i64: 2>, scalar_prefetch = 0 : i64, scratch_operands = 0 : i64, tpu.core_type = #tpu.core_type<tc>, window_params = [{transform_indices = @transform_0, window_bounds = array<i64: 512, 128>}, {pipeline_mode = #tpu.pipeline_mode<synchronous>, transform_indices = @transform_1, window_bounds = array<i64: 1, 128>}, {pipeline_mode = #tpu.pipeline_mode<synchronous>, transform_indices = @transform_2, window_bounds = array<i64: 1, 128>}, {transform_indices = @transform_3, window_bounds = array<i64: 512, 128>}]} {
    %c0 = arith.constant 0 : index
    %c0_0 = arith.constant 0 : index
    %0 = vector.load %arg1[%c0, %c0_0] : memref<512x128xf32, #tpu.memory_space<vmem>>, vector<512x128xf32>
    %c0_1 = arith.constant 0 : index
    %c0_2 = arith.constant 0 : index
    %1 = vector.load %arg2[%c0_1, %c0_2] : memref<1x128xf32, #tpu.memory_space<vmem>>, vector<1x128xf32>
    %2 = vector.broadcast %1 : vector<1x128xf32> to vector<512x128xf32>
    %3 = arith.mulf %0, %2 : vector<512x128xf32>
    %c0_3 = arith.constant 0 : index
    %c0_4 = arith.constant 0 : index
    %4 = vector.load %arg3[%c0_3, %c0_4] : memref<1x128xf32, #tpu.memory_space<vmem>>, vector<1x128xf32>
    %5 = vector.broadcast %4 : vector<1x128xf32> to vector<512x128xf32>
    %6 = arith.addf %3, %5 : vector<512x128xf32>
    %cst = arith.constant 0.000000e+00 : f32
    %7 = vector.broadcast %cst : f32 to vector<512x128xf32>
    %8 = arith.cmpf oge, %6, %7 : vector<512x128xf32>
    %cst_5 = arith.constant 2.000000e-01 : f32
    %9 = vector.broadcast %cst_5 : f32 to vector<512x128xf32>
    %10 = arith.mulf %9, %6 : vector<512x128xf32>
    %11 = arith.select %8, %6, %10 : vector<512x128xi1>, vector<512x128xf32>
    %c0_6 = arith.constant 0 : index
    %c0_7 = arith.constant 0 : index
    %12 = vector.load %arg4[%c0_6, %c0_7] : memref<512x128xf32, #tpu.memory_space<vmem>>, vector<512x128xf32>
    tpu.vector_store %arg4[%c0_6, %c0_7], %11 {strides = array<i32>} : memref<512x128xf32, #tpu.memory_space<vmem>>, vector<512x128xf32>,
    return
  }
  func.func @transform_0(%arg0: i32) -> (i32, i32) {
    %c0_i32 = arith.constant 0 : i32
    %c0_i32_0 = arith.constant 0 : i32
    return %arg0, %c0_i32 : i32, i32
  }
  func.func @transform_1(%arg0: i32) -> (i32, i32) {
    %c0_i32 = arith.constant 0 : i32
    %c0_i32_0 = arith.constant 0 : i32
    %c0_i32_1 = arith.constant 0 : i32
    return %c0_i32, %c0_i32_0 : i32, i32
  }
  func.func @transform_2(%arg0: i32) -> (i32, i32) {
    %c0_i32 = arith.constant 0 : i32
    %c0_i32_0 = arith.constant 0 : i32
    %c0_i32_1 = arith.constant 0 : i32
    return %c0_i32, %c0_i32_0 : i32, i32
  }
  func.func @transform_3(%arg0: i32) -> (i32, i32) {
    %c0_i32 = arith.constant 0 : i32
    %c0_i32_0 = arith.constant 0 : i32
    return %arg0, %c0_i32 : i32, i32
  }
}

</mosaic_0001>

<llo_original>
// kernel: conv_bn_layer.3
$region0: #{conv_bn_layer.3}
  #allocation0 [shape = 'u32[]', space=smem, size = 0x4, offset = 0x4, fixed_abs, tag = 'smem constant byte address 0x4 - core index']
  #allocation1 [shape = 'u32[144,128]{1,0:T(1,128)}', space=vmem, size = 0x12000, scoped, tag = 'internal scratch']
  %s0 = inlined_call_operand.vmem [shape: f32[1024,128], index: 0, kind: input, shape index: {}]
  %s1 = inlined_call_operand.vmem [shape: f32[1,128], index: 1, kind: input, shape index: {}]
  %s2 = inlined_call_operand.vmem [shape: f32[1,128], index: 2, kind: input, shape index: {}]
  %s3 = inlined_call_operand.vmem [shape: f32[1024,128], index: 3, kind: output, shape index: {}]
  %s4 = sld [smem:[#allocation0]]
  $region45: #{conv_bn_layer.3} parent=0
    _
  %s6 = ssub.s32 1, %s4
  %s7 = scalar_select 0, %s6, %s4
  loop: start=0, step=1, limit=4
  $region2: #{conv_bn_layer.3} parent=0 // loop_pre_header
    _
  $region3: #{conv_bn_layer.3} parent=0 // loop_header
    %s9 = sphi 0, %s13
    %p10 = scmp.ge.s32.totalorder %s9, 4
    %s19 = sphi 0, %s21
    %s22 = sphi 0, %s19
    %s23 = sphi 0, %s22
    %s39 = sphi 0, %s23
    %s43 = sphi 0, %s43
    %s45 = sphi 0, %s43
    %s46 = sphi 0, %s45
    %s60 = sphi 0, %s46
    %s64 = sphi 0, %s64
    %s66 = sphi 0, %s64
    %s67 = sphi 0, %s66
    %s81 = sphi 0, %s67
    %s87 = sphi 0, %s89
    %s90 = sphi 0, %s87
    %s91 = sphi 0, %s90
    %s107 = sphi 0, %s91
  $region4: #{conv_bn_layer.3} parent=0 // loop_header_branch
    %12 = sbr.rel (%p10) target = $region8
  $region5: #{conv_bn_layer.3} parent=0 // loop_body
    %s14 = ssub.s32 %s9, 1
    %s15 = ssub.s32 %s9, 2
    %s16 = sadd.s32 %s9, 1
    %s17 = ssub.s32 %s9, %s16
    %p18 = scmp.eq.s32.totalorder %s17, 0
    %s20 = sadd.s32 %s19, 1
    %s21 = scalar_select %p18, %s19, %s20
    %p24 = pneg %p18
    %p25 = scmp.eq.s32.totalorder %s9, 1
    %p26 = por %p24, %p25
    %p27 = scmp.ne.s32.totalorder %s19, %s22
    %p28 = scmp.eq.s32.totalorder %s9, 0
    %p29 = por %p27, %p28
    %p30 = scmp.ne.s32.totalorder %s19, %s22
    %p31 = scmp.eq.s32.totalorder %s14, 1
    %p32 = por %p30, %p31
    %p33 = scmp.ne.s32.totalorder %s22, %s23
    %p34 = scmp.eq.s32.totalorder %s14, 0
    %p35 = por %p33, %p34
    %p36 = scmp.ne.s32.totalorder %s22, %s23
    %p37 = scmp.eq.s32.totalorder %s15, 1
    %p38 = por %p36, %p37
    %p40 = scmp.ne.s32.totalorder %s23, %s39
    %p41 = scmp.eq.s32.totalorder %s15, 0
    %p42 = por %p40, %p41
    %s44 = sadd.s32 %s43, 1
    %p47 = scmp.eq.s32.totalorder %s9, 1
    %p48 = scmp.ne.s32.totalorder %s43, %s45
    %p49 = scmp.eq.s32.totalorder %s9, 0
    %p50 = por %p48, %p49
    %p51 = scmp.ne.s32.totalorder %s43, %s45
    %p52 = scmp.eq.s32.totalorder %s14, 1
    %p53 = por %p51, %p52
    %p54 = scmp.ne.s32.totalorder %s45, %s46
    %p55 = scmp.eq.s32.totalorder %s14, 0
    %p56 = por %p54, %p55
    %p57 = scmp.ne.s32.totalorder %s45, %s46
    %p58 = scmp.eq.s32.totalorder %s15, 1
    %p59 = por %p57, %p58
    %p61 = scmp.ne.s32.totalorder %s46, %s60
    %p62 = scmp.eq.s32.totalorder %s15, 0
    %p63 = por %p61, %p62
    %s65 = sadd.s32 %s64, 1
    %p68 = scmp.eq.s32.totalorder %s9, 1
    %p69 = scmp.ne.s32.totalorder %s64, %s66
    %p70 = scmp.eq.s32.totalorder %s9, 0
    %p71 = por %p69, %p70
    %p72 = scmp.ne.s32.totalorder %s64, %s66
    %p73 = scmp.eq.s32.totalorder %s14, 1
    %p74 = por %p72, %p73
    %p75 = scmp.ne.s32.totalorder %s66, %s67
    %p76 = scmp.eq.s32.totalorder %s14, 0
    %p77 = por %p75, %p76
    %p78 = scmp.ne.s32.totalorder %s66, %s67
    %p79 = scmp.eq.s32.totalorder %s15, 1
    %p80 = por %p78, %p79
    %p82 = scmp.ne.s32.totalorder %s67, %s81
    %p83 = scmp.eq.s32.totalorder %s15, 0
    %p84 = por %p82, %p83
    %s85 = ssub.s32 %s9, %s16
    %p86 = scmp.eq.s32.totalorder %s85, 0
    %s88 = sadd.s32 %s87, 1
    %s89 = scalar_select %p86, %s87, %s88
    %p92 = pneg %p86
    %p93 = scmp.eq.s32.totalorder %s9, 1
    %p94 = por %p92, %p93
    %p95 = scmp.ne.s32.totalorder %s87, %s90
    %p96 = scmp.eq.s32.totalorder %s9, 0
    %p97 = por %p95, %p96
    %p98 = scmp.ne.s32.totalorder %s87, %s90
    %p99 = scmp.eq.s32.totalorder %s14, 1
    %p100 = por %p98, %p99
    %p101 = scmp.ne.s32.totalorder %s90, %s91
    %p102 = scmp.eq.s32.totalorder %s14, 0
    %p103 = por %p101, %p102
    %p104 = scmp.ne.s32.totalorder %s90, %s91
    %p105 = scmp.eq.s32.totalorder %s15, 1
    %p106 = por %p104, %p105
    %p108 = scmp.ne.s32.totalorder %s91, %s107
    %p109 = scmp.eq.s32.totalorder %s15, 0
    %p110 = por %p108, %p109
    %p111 = scmp.le.s32.totalorder 1, %s9
    %p112 = scmp.lt.s32.totalorder %s9, 3
    %p113 = pnand %p111, %p112
    %p114 = pneg %p113
    // Predicated region
    $region9: #{conv_bn_layer.3} parent=5 // pred_check
      _
    $region10: #{conv_bn_layer.3} parent=5 // pred_check_branch
      %116 = sbr.rel (%p113) target = $region12
    $region11: #{conv_bn_layer.3} parent=5 // pred_region
      %s117 = ssub.s32 %s9, 1
      // Predicated region
      $region13: #{conv_bn_layer.3} parent=11 // pred_check
        %p118 = pneg %p56
      $region14: #{conv_bn_layer.3} parent=11 // pred_check_branch
        %120 = sbr.rel (%p118) target = $region16
      $region15: #{conv_bn_layer.3} parent=11 // pred_region
        _
      $region16: #{conv_bn_layer.3} parent=11 // pred_fallthru
        _
      // Predicated region
      $region17: #{conv_bn_layer.3} parent=11 // pred_check
        %p121 = pneg %p77
      $region18: #{conv_bn_layer.3} parent=11 // pred_check_branch
        %123 = sbr.rel (%p121) target = $region20
      $region19: #{conv_bn_layer.3} parent=11 // pred_region
        _
      $region20: #{conv_bn_layer.3} parent=11 // pred_fallthru
        _
    $region12: #{conv_bn_layer.3} parent=5 // pred_fallthru
      _
    %p124 = scmp.lt.s32.totalorder %s9, 2
    // Predicated region
    $region21: #{conv_bn_layer.3} parent=5 // pred_check
      %p125 = pneg %p124
    $region22: #{conv_bn_layer.3} parent=5 // pred_check_branch
      %127 = sbr.rel (%p125) target = $region24
    $region23: #{conv_bn_layer.3} parent=5 // pred_region
      // Predicated region
      $region25: #{conv_bn_layer.3} parent=23 // pred_check
        %p128 = pneg %p29
      $region26: #{conv_bn_layer.3} parent=23 // pred_check_branch
        %130 = sbr.rel (%p128) target = $region28
      $region27: #{conv_bn_layer.3} parent=23 // pred_region
        %s131 = smul.u32 64, %s9
        %p132 = scmp.lt.s32.totalorder %s131, 127
        %s133 = scalar_select %p132, %s131, 127
        %s134 = smul.addr %s133, 8
        %s135 = scalar_lea.vmem %s0, %s134
        %s136 = smul.u32 64, %s9
      $region28: #{conv_bn_layer.3} parent=23 // pred_fallthru
        _
    $region24: #{conv_bn_layer.3} parent=5 // pred_fallthru
      _
    %p137 = scmp.le.s32.totalorder 1, %s9
    %p138 = scmp.lt.s32.totalorder %s9, 3
    %p139 = pnand %p137, %p138
    %p140 = pneg %p139
    // Predicated region
    $region29: #{conv_bn_layer.3} parent=5 // pred_check
      _
    $region30: #{conv_bn_layer.3} parent=5 // pred_check_branch
      %142 = sbr.rel (%p139) target = $region32
    $region31: #{conv_bn_layer.3} parent=5 // pred_region
      %s143 = ssub.s32 %s9, 1
      %s144 = smul.u32 64, %s14
      %p145 = scmp.lt.s32.totalorder %s144, 127
      %s146 = scalar_select %p145, %s144, 127
      %s147 = smul.addr %s146, 8
      %s148 = scalar_lea.vmem %s0, %s147
      %p149 = pneg %p35
      %p150 = pneg %p32
      %p151 = pneg %p56
      %p152 = pneg %p53
      %p153 = pneg %p77
      %p154 = pneg %p74
      %p155 = pneg %p103
      %p156 = pneg %p100
      %s157 = smul.u32 64, %s14
      %p158 = scmp.lt.s32.totalorder %s157, 127
      %s159 = scalar_select %p158, %s157, 127
      %s160 = smul.addr %s159, 8
      %s161 = scalar_lea.vmem %s3, %s160
      %s162 = smul.u32 64, %s14
      %p163 = scmp.lt.s32.totalorder %s162, 127
      %s164 = scalar_select %p163, %s162, 127
      %s165 = smul.addr %s164, 8
      %s166 = scalar_lea.vmem %s0, %s165
      %s167 = smul.u32 64, %s14
      %s168 = smul.u32 64, %s14
      %p169 = scmp.lt.s32.totalorder %s168, 127
      %s170 = scalar_select %p169, %s168, 127
      %s171 = smul.addr %s170, 8
      %s172 = scalar_lea.vmem %s3, %s171
      %s173 = smul.u32 64, %s14
      %v174 = vld [vmem:[%s166] sm:$0xff]
      %v175 = vld [vmem:[%s166 + $0x8] sm:$0xff]
      %v176 = vld [vmem:[%s166 + $0x10] sm:$0xff]
      %v177 = vld [vmem:[%s166 + $0x18] sm:$0xff]
      %v178 = vld [vmem:[%s166 + $0x20] sm:$0xff]
      %v179 = vld [vmem:[%s166 + $0x28] sm:$0xff]
      %v180 = vld [vmem:[%s166 + $0x30] sm:$0xff]
      %v181 = vld [vmem:[%s166 + $0x38] sm:$0xff]
      %v182 = vld [vmem:[%s166 + $0x40] sm:$0xff]
      %v183 = vld [vmem:[%s166 + $0x48] sm:$0xff]
      %v184 = vld [vmem:[%s166 + $0x50] sm:$0xff]
      %v185 = vld [vmem:[%s166 + $0x58] sm:$0xff]
      %v186 = vld [vmem:[%s166 + $0x60] sm:$0xff]
      %v187 = vld [vmem:[%s166 + $0x68] sm:$0xff]
      %v188 = vld [vmem:[%s166 + $0x70] sm:$0xff]
      %v189 = vld [vmem:[%s166 + $0x78] sm:$0xff]
      %v190 = vld [vmem:[%s166 + $0x80] sm:$0xff]
      %v191 = vld [vmem:[%s166 + $0x88] sm:$0xff]
      %v192 = vld [vmem:[%s166 + $0x90] sm:$0xff]
      %v193 = vld [vmem:[%s166 + $0x98] sm:$0xff]
      %v194 = vld [vmem:[%s166 + $0xa0] sm:$0xff]
      %v195 = vld [vmem:[%s166 + $0xa8] sm:$0xff]
      %v196 = vld [vmem:[%s166 + $0xb0] sm:$0xff]
      %v197 = vld [vmem:[%s166 + $0xb8] sm:$0xff]
      %v198 = vld [vmem:[%s166 + $0xc0] sm:$0xff]
      %v199 = vld [vmem:[%s166 + $0xc8] sm:$0xff]
      %v200 = vld [vmem:[%s166 + $0xd0] sm:$0xff]
      %v201 = vld [vmem:[%s166 + $0xd8] sm:$0xff]
      %v202 = vld [vmem:[%s166 + $0xe0] sm:$0xff]
      %v203 = vld [vmem:[%s166 + $0xe8] sm:$0xff]
      %v204 = vld [vmem:[%s166 + $0xf0] sm:$0xff]
      %v205 = vld [vmem:[%s166 + $0xf8] sm:$0xff]
      %v206 = vld [vmem:[%s166 + $0x100] sm:$0xff]
      %v207 = vld [vmem:[%s166 + $0x108] sm:$0xff]
      %v208 = vld [vmem:[%s166 + $0x110] sm:$0xff]
      %v209 = vld [vmem:[%s166 + $0x118] sm:$0xff]
      %v210 = vld [vmem:[%s166 + $0x120] sm:$0xff]
      %v211 = vld [vmem:[%s166 + $0x128] sm:$0xff]
      %v212 = vld [vmem:[%s166 + $0x130] sm:$0xff]
      %v213 = vld [vmem:[%s166 + $0x138] sm:$0xff]
      %v214 = vld [vmem:[%s166 + $0x140] sm:$0xff]
      %v215 = vld [vmem:[%s166 + $0x148] sm:$0xff]
      %v216 = vld [vmem:[%s166 + $0x150] sm:$0xff]
      %v217 = vld [vmem:[%s166 + $0x158] sm:$0xff]
      %v218 = vld [vmem:[%s166 + $0x160] sm:$0xff]
      %v219 = vld [vmem:[%s166 + $0x168] sm:$0xff]
      %v220 = vld [vmem:[%s166 + $0x170] sm:$0xff]
      %v221 = vld [vmem:[%s166 + $0x178] sm:$0xff]
      %v222 = vld [vmem:[%s166 + $0x180] sm:$0xff]
      %v223 = vld [vmem:[%s166 + $0x188] sm:$0xff]
      %v224 = vld [vmem:[%s166 + $0x190] sm:$0xff]
      %v225 = vld [vmem:[%s166 + $0x198] sm:$0xff]
      %v226 = vld [vmem:[%s166 + $0x1a0] sm:$0xff]
      %v227 = vld [vmem:[%s166 + $0x1a8] sm:$0xff]
      %v228 = vld [vmem:[%s166 + $0x1b0] sm:$0xff]
      %v229 = vld [vmem:[%s166 + $0x1b8] sm:$0xff]
      %v230 = vld [vmem:[%s166 + $0x1c0] sm:$0xff]
      %v231 = vld [vmem:[%s166 + $0x1c8] sm:$0xff]
      %v232 = vld [vmem:[%s166 + $0x1d0] sm:$0xff]
      %v233 = vld [vmem:[%s166 + $0x1d8] sm:$0xff]
      %v234 = vld [vmem:[%s166 + $0x1e0] sm:$0xff]
      %v235 = vld [vmem:[%s166 + $0x1e8] sm:$0xff]
      %v236 = vld [vmem:[%s166 + $0x1f0] sm:$0xff]
      %v237 = vld [vmem:[%s166 + $0x1f8] sm:$0xff]
      %v238 = vld [vmem:[%s1] sm:$0x1]
      %v240 = vlaneseq
      %v241 = vshrl.u32 %v240, 7
      %v242 = vsub.s32 0, %v241
      %v243 = vrot.slane %v238, %v242
      %v245 = vmul.f32 %v174, %v243
      %v246 = vmul.f32 %v175, %v243
      %v247 = vmul.f32 %v176, %v243
      %v248 = vmul.f32 %v177, %v243
      %v249 = vmul.f32 %v178, %v243
      %v250 = vmul.f32 %v179, %v243
      %v251 = vmul.f32 %v180, %v243
      %v252 = vmul.f32 %v181, %v243
      %v253 = vmul.f32 %v182, %v243
      %v254 = vmul.f32 %v183, %v243
      %v255 = vmul.f32 %v184, %v243
      %v256 = vmul.f32 %v185, %v243
      %v257 = vmul.f32 %v186, %v243
      %v258 = vmul.f32 %v187, %v243
      %v259 = vmul.f32 %v188, %v243
      %v260 = vmul.f32 %v189, %v243
      %v261 = vmul.f32 %v190, %v243
      %v262 = vmul.f32 %v191, %v243
      %v263 = vmul.f32 %v192, %v243
      %v264 = vmul.f32 %v193, %v243
      %v265 = vmul.f32 %v194, %v243
      %v266 = vmul.f32 %v195, %v243
      %v267 = vmul.f32 %v196, %v243
      %v268 = vmul.f32 %v197, %v243
      %v269 = vmul.f32 %v198, %v243
      %v270 = vmul.f32 %v199, %v243
      %v271 = vmul.f32 %v200, %v243
      %v272 = vmul.f32 %v201, %v243
      %v273 = vmul.f32 %v202, %v243
      %v274 = vmul.f32 %v203, %v243
      %v275 = vmul.f32 %v204, %v243
      %v276 = vmul.f32 %v205, %v243
      %v277 = vmul.f32 %v206, %v243
      %v278 = vmul.f32 %v207, %v243
      %v279 = vmul.f32 %v208, %v243
      %v280 = vmul.f32 %v209, %v243
      %v281 = vmul.f32 %v210, %v243
      %v282 = vmul.f32 %v211, %v243
      %v283 = vmul.f32 %v212, %v243
      %v284 = vmul.f32 %v213, %v243
      %v285 = vmul.f32 %v214, %v243
      %v286 = vmul.f32 %v215, %v243
      %v287 = vmul.f32 %v216, %v243
      %v288 = vmul.f32 %v217, %v243
      %v289 = vmul.f32 %v218, %v243
      %v290 = vmul.f32 %v219, %v243
      %v291 = vmul.f32 %v220, %v243
      %v292 = vmul.f32 %v221, %v243
      %v293 = vmul.f32 %v222, %v243
      %v294 = vmul.f32 %v223, %v243
      %v295 = vmul.f32 %v224, %v243
      %v296 = vmul.f32 %v225, %v243
      %v297 = vmul.f32 %v226, %v243
      %v298 = vmul.f32 %v227, %v243
      %v299 = vmul.f32 %v228, %v243
      %v300 = vmul.f32 %v229, %v243
      %v301 = vmul.f32 %v230, %v243
      %v302 = vmul.f32 %v231, %v243
      %v303 = vmul.f32 %v232, %v243
      %v304 = vmul.f32 %v233, %v243
      %v305 = vmul.f32 %v234, %v243
      %v306 = vmul.f32 %v235, %v243
      %v307 = vmul.f32 %v236, %v243
      %v308 = vmul.f32 %v237, %v243
      %v309 = vld [vmem:[%s2] sm:$0x1]
      %v311 = vlaneseq
      %v312 = vshrl.u32 %v311, 7
      %v313 = vsub.s32 0, %v312
      %v314 = vrot.slane %v309, %v313
      %v316 = vadd.f32 %v245, %v314
      %v317 = vadd.f32 %v246, %v314
      %v318 = vadd.f32 %v247, %v314
      %v319 = vadd.f32 %v248, %v314
      %v320 = vadd.f32 %v249, %v314
      %v321 = vadd.f32 %v250, %v314
      %v322 = vadd.f32 %v251, %v314
      %v323 = vadd.f32 %v252, %v314
      %v324 = vadd.f32 %v253, %v314
      %v325 = vadd.f32 %v254, %v314
      %v326 = vadd.f32 %v255, %v314
      %v327 = vadd.f32 %v256, %v314
      %v328 = vadd.f32 %v257, %v314
      %v329 = vadd.f32 %v258, %v314
      %v330 = vadd.f32 %v259, %v314
      %v331 = vadd.f32 %v260, %v314
      %v332 = vadd.f32 %v261, %v314
      %v333 = vadd.f32 %v262, %v314
      %v334 = vadd.f32 %v263, %v314
      %v335 = vadd.f32 %v264, %v314
      %v336 = vadd.f32 %v265, %v314
      %v337 = vadd.f32 %v266, %v314
      %v338 = vadd.f32 %v267, %v314
      %v339 = vadd.f32 %v268, %v314
      %v340 = vadd.f32 %v269, %v314
      %v341 = vadd.f32 %v270, %v314
      %v342 = vadd.f32 %v271, %v314
      %v343 = vadd.f32 %v272, %v314
      %v344 = vadd.f32 %v273, %v314
      %v345 = vadd.f32 %v274, %v314
      %v346 = vadd.f32 %v275, %v314
      %v347 = vadd.f32 %v276, %v314
      %v348 = vadd.f32 %v277, %v314
      %v349 = vadd.f32 %v278, %v314
      %v350 = vadd.f32 %v279, %v314
      %v351 = vadd.f32 %v280, %v314
      %v352 = vadd.f32 %v281, %v314
      %v353 = vadd.f32 %v282, %v314
      %v354 = vadd.f32 %v283, %v314
      %v355 = vadd.f32 %v284, %v314
      %v356 = vadd.f32 %v285, %v314
      %v357 = vadd.f32 %v286, %v314
      %v358 = vadd.f32 %v287, %v314
      %v359 = vadd.f32 %v288, %v314
      %v360 = vadd.f32 %v289, %v314
      %v361 = vadd.f32 %v290, %v314
      %v362 = vadd.f32 %v291, %v314
      %v363 = vadd.f32 %v292, %v314
      %v364 = vadd.f32 %v293, %v314
      %v365 = vadd.f32 %v294, %v314
      %v366 = vadd.f32 %v295, %v314
      %v367 = vadd.f32 %v296, %v314
      %v368 = vadd.f32 %v297, %v314
      %v369 = vadd.f32 %v298, %v314
      %v370 = vadd.f32 %v299, %v314
      %v371 = vadd.f32 %v300, %v314
      %v372 = vadd.f32 %v301, %v314
      %v373 = vadd.f32 %v302, %v314
      %v374 = vadd.f32 %v303, %v314
      %v375 = vadd.f32 %v304, %v314
      %v376 = vadd.f32 %v305, %v314
      %v377 = vadd.f32 %v306, %v314
      %v378 = vadd.f32 %v307, %v314
      %v379 = vadd.f32 %v308, %v314
      %vm380 = vcmp.ge.f32.partialorder %v316, 0.0
      %vm381 = vcmp.ge.f32.partialorder %v317, 0.0
      %vm382 = vcmp.ge.f32.partialorder %v318, 0.0
      %vm383 = vcmp.ge.f32.partialorder %v319, 0.0
      %vm384 = vcmp.ge.f32.partialorder %v320, 0.0
      %vm385 = vcmp.ge.f32.partialorder %v321, 0.0
      %vm386 = vcmp.ge.f32.partialorder %v322, 0.0
      %vm387 = vcmp.ge.f32.partialorder %v323, 0.0
      %vm388 = vcmp.ge.f32.partialorder %v324, 0.0
      %vm389 = vcmp.ge.f32.partialorder %v325, 0.0
      %vm390 = vcmp.ge.f32.partialorder %v326, 0.0
      %vm391 = vcmp.ge.f32.partialorder %v327, 0.0
      %vm392 = vcmp.ge.f32.partialorder %v328, 0.0
      %vm393 = vcmp.ge.f32.partialorder %v329, 0.0
      %vm394 = vcmp.ge.f32.partialorder %v330, 0.0
      %vm395 = vcmp.ge.f32.partialorder %v331, 0.0
      %vm396 = vcmp.ge.f32.partialorder %v332, 0.0
      %vm397 = vcmp.ge.f32.partialorder %v333, 0.0
      %vm398 = vcmp.ge.f32.partialorder %v334, 0.0
      %vm399 = vcmp.ge.f32.partialorder %v335, 0.0
      %vm400 = vcmp.ge.f32.partialorder %v336, 0.0
      %vm401 = vcmp.ge.f32.partialorder %v337, 0.0
      %vm402 = vcmp.ge.f32.partialorder %v338, 0.0
      %vm403 = vcmp.ge.f32.partialorder %v339, 0.0
      %vm404 = vcmp.ge.f32.partialorder %v340, 0.0
      %vm405 = vcmp.ge.f32.partialorder %v341, 0.0
      %vm406 = vcmp.ge.f32.partialorder %v342, 0.0
      %vm407 = vcmp.ge.f32.partialorder %v343, 0.0
      %vm408 = vcmp.ge.f32.partialorder %v344, 0.0
      %vm409 = vcmp.ge.f32.partialorder %v345, 0.0
      %vm410 = vcmp.ge.f32.partialorder %v346, 0.0
      %vm411 = vcmp.ge.f32.partialorder %v347, 0.0
      %vm412 = vcmp.ge.f32.partialorder %v348, 0.0
      %vm413 = vcmp.ge.f32.partialorder %v349, 0.0
      %vm414 = vcmp.ge.f32.partialorder %v350, 0.0
      %vm415 = vcmp.ge.f32.partialorder %v351, 0.0
      %vm416 = vcmp.ge.f32.partialorder %v352, 0.0
      %vm417 = vcmp.ge.f32.partialorder %v353, 0.0
      %vm418 = vcmp.ge.f32.partialorder %v354, 0.0
      %vm419 = vcmp.ge.f32.partialorder %v355, 0.0
      %vm420 = vcmp.ge.f32.partialorder %v356, 0.0
      %vm421 = vcmp.ge.f32.partialorder %v357, 0.0
      %vm422 = vcmp.ge.f32.partialorder %v358, 0.0
      %vm423 = vcmp.ge.f32.partialorder %v359, 0.0
      %vm424 = vcmp.ge.f32.partialorder %v360, 0.0
      %vm425 = vcmp.ge.f32.partialorder %v361, 0.0
      %vm426 = vcmp.ge.f32.partialorder %v362, 0.0
      %vm427 = vcmp.ge.f32.partialorder %v363, 0.0
      %vm428 = vcmp.ge.f32.partialorder %v364, 0.0
      %vm429 = vcmp.ge.f32.partialorder %v365, 0.0
      %vm430 = vcmp.ge.f32.partialorder %v366, 0.0
      %vm431 = vcmp.ge.f32.partialorder %v367, 0.0
      %vm432 = vcmp.ge.f32.partialorder %v368, 0.0
      %vm433 = vcmp.ge.f32.partialorder %v369, 0.0
      %vm434 = vcmp.ge.f32.partialorder %v370, 0.0
      %vm435 = vcmp.ge.f32.partialorder %v371, 0.0
      %vm436 = vcmp.ge.f32.partialorder %v372, 0.0
      %vm437 = vcmp.ge.f32.partialorder %v373, 0.0
      %vm438 = vcmp.ge.f32.partialorder %v374, 0.0
      %vm439 = vcmp.ge.f32.partialorder %v375, 0.0
      %vm440 = vcmp.ge.f32.partialorder %v376, 0.0
      %vm441 = vcmp.ge.f32.partialorder %v377, 0.0
      %vm442 = vcmp.ge.f32.partialorder %v378, 0.0
      %vm443 = vcmp.ge.f32.partialorder %v379, 0.0
      %v444 = vmul.f32 %v316, 0.2
      %v445 = vmul.f32 %v317, 0.2
      %v446 = vmul.f32 %v318, 0.2
      %v447 = vmul.f32 %v319, 0.2
      %v448 = vmul.f32 %v320, 0.2
      %v449 = vmul.f32 %v321, 0.2
      %v450 = vmul.f32 %v322, 0.2
      %v451 = vmul.f32 %v323, 0.2
      %v452 = vmul.f32 %v324, 0.2
      %v453 = vmul.f32 %v325, 0.2
      %v454 = vmul.f32 %v326, 0.2
      %v455 = vmul.f32 %v327, 0.2
      %v456 = vmul.f32 %v328, 0.2
      %v457 = vmul.f32 %v329, 0.2
      %v458 = vmul.f32 %v330, 0.2
      %v459 = vmul.f32 %v331, 0.2
      %v460 = vmul.f32 %v332, 0.2
      %v461 = vmul.f32 %v333, 0.2
      %v462 = vmul.f32 %v334, 0.2
      %v463 = vmul.f32 %v335, 0.2
      %v464 = vmul.f32 %v336, 0.2
      %v465 = vmul.f32 %v337, 0.2
      %v466 = vmul.f32 %v338, 0.2
      %v467 = vmul.f32 %v339, 0.2
      %v468 = vmul.f32 %v340, 0.2
      %v469 = vmul.f32 %v341, 0.2
      %v470 = vmul.f32 %v342, 0.2
      %v471 = vmul.f32 %v343, 0.2
      %v472 = vmul.f32 %v344, 0.2
      %v473 = vmul.f32 %v345, 0.2
      %v474 = vmul.f32 %v346, 0.2
      %v475 = vmul.f32 %v347, 0.2
      %v476 = vmul.f32 %v348, 0.2
      %v477 = vmul.f32 %v349, 0.2
      %v478 = vmul.f32 %v350, 0.2
      %v479 = vmul.f32 %v351, 0.2
      %v480 = vmul.f32 %v352, 0.2
      %v481 = vmul.f32 %v353, 0.2
      %v482 = vmul.f32 %v354, 0.2
      %v483 = vmul.f32 %v355, 0.2
      %v484 = vmul.f32 %v356, 0.2
      %v485 = vmul.f32 %v357, 0.2
      %v486 = vmul.f32 %v358, 0.2
      %v487 = vmul.f32 %v359, 0.2
      %v488 = vmul.f32 %v360, 0.2
      %v489 = vmul.f32 %v361, 0.2
      %v490 = vmul.f32 %v362, 0.2
      %v491 = vmul.f32 %v363, 0.2
      %v492 = vmul.f32 %v364, 0.2
      %v493 = vmul.f32 %v365, 0.2
      %v494 = vmul.f32 %v366, 0.2
      %v495 = vmul.f32 %v367, 0.2
      %v496 = vmul.f32 %v368, 0.2
      %v497 = vmul.f32 %v369, 0.2
      %v498 = vmul.f32 %v370, 0.2
      %v499 = vmul.f32 %v371, 0.2
      %v500 = vmul.f32 %v372, 0.2
      %v501 = vmul.f32 %v373, 0.2
      %v502 = vmul.f32 %v374, 0.2
      %v503 = vmul.f32 %v375, 0.2
      %v504 = vmul.f32 %v376, 0.2
      %v505 = vmul.f32 %v377, 0.2
      %v506 = vmul.f32 %v378, 0.2
      %v507 = vmul.f32 %v379, 0.2
      %v508 = vsel %vm380, %v316, %v444
      %v509 = vsel %vm381, %v317, %v445
      %v510 = vsel %vm382, %v318, %v446
      %v511 = vsel %vm383, %v319, %v447
      %v512 = vsel %vm384, %v320, %v448
      %v513 = vsel %vm385, %v321, %v449
      %v514 = vsel %vm386, %v322, %v450
      %v515 = vsel %vm387, %v323, %v451
      %v516 = vsel %vm388, %v324, %v452
      %v517 = vsel %vm389, %v325, %v453
      %v518 = vsel %vm390, %v326, %v454
      %v519 = vsel %vm391, %v327, %v455
      %v520 = vsel %vm392, %v328, %v456
      %v521 = vsel %vm393, %v329, %v457
      %v522 = vsel %vm394, %v330, %v458
      %v523 = vsel %vm395, %v331, %v459
      %v524 = vsel %vm396, %v332, %v460
      %v525 = vsel %vm397, %v333, %v461
      %v526 = vsel %vm398, %v334, %v462
      %v527 = vsel %vm399, %v335, %v463
      %v528 = vsel %vm400, %v336, %v464
      %v529 = vsel %vm401, %v337, %v465
      %v530 = vsel %vm402, %v338, %v466
      %v531 = vsel %vm403, %v339, %v467
      %v532 = vsel %vm404, %v340, %v468
      %v533 = vsel %vm405, %v341, %v469
      %v534 = vsel %vm406, %v342, %v470
      %v535 = vsel %vm407, %v343, %v471
      %v536 = vsel %vm408, %v344, %v472
      %v537 = vsel %vm409, %v345, %v473
      %v538 = vsel %vm410, %v346, %v474
      %v539 = vsel %vm411, %v347, %v475
      %v540 = vsel %vm412, %v348, %v476
      %v541 = vsel %vm413, %v349, %v477
      %v542 = vsel %vm414, %v350, %v478
      %v543 = vsel %vm415, %v351, %v479
      %v544 = vsel %vm416, %v352, %v480
      %v545 = vsel %vm417, %v353, %v481
      %v546 = vsel %vm418, %v354, %v482
      %v547 = vsel %vm419, %v355, %v483
      %v548 = vsel %vm420, %v356, %v484
      %v549 = vsel %vm421, %v357, %v485
      %v550 = vsel %vm422, %v358, %v486
      %v551 = vsel %vm423, %v359, %v487
      %v552 = vsel %vm424, %v360, %v488
      %v553 = vsel %vm425, %v361, %v489
      %v554 = vsel %vm426, %v362, %v490
      %v555 = vsel %vm427, %v363, %v491
      %v556 = vsel %vm428, %v364, %v492
      %v557 = vsel %vm429, %v365, %v493
      %v558 = vsel %vm430, %v366, %v494
      %v559 = vsel %vm431, %v367, %v495
      %v560 = vsel %vm432, %v368, %v496
      %v561 = vsel %vm433, %v369, %v497
      %v562 = vsel %vm434, %v370, %v498
      %v563 = vsel %vm435, %v371, %v499
      %v564 = vsel %vm436, %v372, %v500
      %v565 = vsel %vm437, %v373, %v501
      %v566 = vsel %vm438, %v374, %v502
      %v567 = vsel %vm439, %v375, %v503
      %v568 = vsel %vm440, %v376, %v504
      %v569 = vsel %vm441, %v377, %v505
      %v570 = vsel %vm442, %v378, %v506
      %v571 = vsel %vm443, %v379, %v507
      %572 = vst [vmem:[%s172] sm:$0xff] %v508
      %573 = vst [vmem:[%s172 + $0x8] sm:$0xff] %v509
      %574 = vst [vmem:[%s172 + $0x10] sm:$0xff] %v510
      %575 = vst [vmem:[%s172 + $0x18] sm:$0xff] %v511
      %576 = vst [vmem:[%s172 + $0x20] sm:$0xff] %v512
      %577 = vst [vmem:[%s172 + $0x28] sm:$0xff] %v513
      %578 = vst [vmem:[%s172 + $0x30] sm:$0xff] %v514
      %579 = vst [vmem:[%s172 + $0x38] sm:$0xff] %v515
      %580 = vst [vmem:[%s172 + $0x40] sm:$0xff] %v516
      %581 = vst [vmem:[%s172 + $0x48] sm:$0xff] %v517
      %582 = vst [vmem:[%s172 + $0x50] sm:$0xff] %v518
      %583 = vst [vmem:[%s172 + $0x58] sm:$0xff] %v519
      %584 = vst [vmem:[%s172 + $0x60] sm:$0xff] %v520
      %585 = vst [vmem:[%s172 + $0x68] sm:$0xff] %v521
      %586 = vst [vmem:[%s172 + $0x70] sm:$0xff] %v522
      %587 = vst [vmem:[%s172 + $0x78] sm:$0xff] %v523
      %588 = vst [vmem:[%s172 + $0x80] sm:$0xff] %v524
      %589 = vst [vmem:[%s172 + $0x88] sm:$0xff] %v525
      %590 = vst [vmem:[%s172 + $0x90] sm:$0xff] %v526
      %591 = vst [vmem:[%s172 + $0x98] sm:$0xff] %v527
      %592 = vst [vmem:[%s172 + $0xa0] sm:$0xff] %v528
      %593 = vst [vmem:[%s172 + $0xa8] sm:$0xff] %v529
      %594 = vst [vmem:[%s172 + $0xb0] sm:$0xff] %v530
      %595 = vst [vmem:[%s172 + $0xb8] sm:$0xff] %v531
      %596 = vst [vmem:[%s172 + $0xc0] sm:$0xff] %v532
      %597 = vst [vmem:[%s172 + $0xc8] sm:$0xff] %v533
      %598 = vst [vmem:[%s172 + $0xd0] sm:$0xff] %v534
      %599 = vst [vmem:[%s172 + $0xd8] sm:$0xff] %v535
      %600 = vst [vmem:[%s172 + $0xe0] sm:$0xff] %v536
      %601 = vst [vmem:[%s172 + $0xe8] sm:$0xff] %v537
      %602 = vst [vmem:[%s172 + $0xf0] sm:$0xff] %v538
      %603 = vst [vmem:[%s172 + $0xf8] sm:$0xff] %v539
      %604 = vst [vmem:[%s172 + $0x100] sm:$0xff] %v540
      %605 = vst [vmem:[%s172 + $0x108] sm:$0xff] %v541
      %606 = vst [vmem:[%s172 + $0x110] sm:$0xff] %v542
      %607 = vst [vmem:[%s172 + $0x118] sm:$0xff] %v543
      %608 = vst [vmem:[%s172 + $0x120] sm:$0xff] %v544
      %609 = vst [vmem:[%s172 + $0x128] sm:$0xff] %v545
      %610 = vst [vmem:[%s172 + $0x130] sm:$0xff] %v546
      %611 = vst [vmem:[%s172 + $0x138] sm:$0xff] %v547
      %612 = vst [vmem:[%s172 + $0x140] sm:$0xff] %v548
      %613 = vst [vmem:[%s172 + $0x148] sm:$0xff] %v549
      %614 = vst [vmem:[%s172 + $0x150] sm:$0xff] %v550
      %615 = vst [vmem:[%s172 + $0x158] sm:$0xff] %v551
      %616 = vst [vmem:[%s172 + $0x160] sm:$0xff] %v552
      %617 = vst [vmem:[%s172 + $0x168] sm:$0xff] %v553
      %618 = vst [vmem:[%s172 + $0x170] sm:$0xff] %v554
      %619 = vst [vmem:[%s172 + $0x178] sm:$0xff] %v555
      %620 = vst [vmem:[%s172 + $0x180] sm:$0xff] %v556
      %621 = vst [vmem:[%s172 + $0x188] sm:$0xff] %v557
      %622 = vst [vmem:[%s172 + $0x190] sm:$0xff] %v558
      %623 = vst [vmem:[%s172 + $0x198] sm:$0xff] %v559
      %624 = vst [vmem:[%s172 + $0x1a0] sm:$0xff] %v560
      %625 = vst [vmem:[%s172 + $0x1a8] sm:$0xff] %v561
      %626 = vst [vmem:[%s172 + $0x1b0] sm:$0xff] %v562
      %627 = vst [vmem:[%s172 + $0x1b8] sm:$0xff] %v563
      %628 = vst [vmem:[%s172 + $0x1c0] sm:$0xff] %v564
      %629 = vst [vmem:[%s172 + $0x1c8] sm:$0xff] %v565
      %630 = vst [vmem:[%s172 + $0x1d0] sm:$0xff] %v566
      %631 = vst [vmem:[%s172 + $0x1d8] sm:$0xff] %v567
      %632 = vst [vmem:[%s172 + $0x1e0] sm:$0xff] %v568
      %633 = vst [vmem:[%s172 + $0x1e8] sm:$0xff] %v569
      %634 = vst [vmem:[%s172 + $0x1f0] sm:$0xff] %v570
      %635 = vst [vmem:[%s172 + $0x1f8] sm:$0xff] %v571
      %s636 = smul.u32 64, %s14
      %p637 = scmp.lt.s32.totalorder %s636, 127
      %s638 = scalar_select %p637, %s636, 127
      %s639 = smul.addr %s638, 8
      %s640 = scalar_lea.vmem %s3, %s639
      // Predicated region
      $region33: #{conv_bn_layer.3} parent=31 // pred_check
        %p641 = pneg %p100
      $region34: #{conv_bn_layer.3} parent=31 // pred_check_branch
        %643 = sbr.rel (%p641) target = $region36
      $region35: #{conv_bn_layer.3} parent=31 // pred_region
        %s644 = smul.u32 64, %s14
      $region36: #{conv_bn_layer.3} parent=31 // pred_fallthru
        _
    $region32: #{conv_bn_layer.3} parent=5 // pred_fallthru
      _
    %p645 = scmp.le.s32.totalorder 2, %s9
    // Predicated region
    $region37: #{conv_bn_layer.3} parent=5 // pred_check
      %p646 = pneg %p645
    $region38: #{conv_bn_layer.3} parent=5 // pred_check_branch
      %648 = sbr.rel (%p646) target = $region40
    $region39: #{conv_bn_layer.3} parent=5 // pred_region
      %s649 = ssub.s32 %s9, 2
      // Predicated region
      $region41: #{conv_bn_layer.3} parent=39 // pred_check
        %p650 = pneg %p106
      $region42: #{conv_bn_layer.3} parent=39 // pred_check_branch
        %652 = sbr.rel (%p650) target = $region44
      $region43: #{conv_bn_layer.3} parent=39 // pred_region
        %s653 = smul.u32 64, %s15
        %p654 = scmp.lt.s32.totalorder %s653, 127
        %s655 = scalar_select %p654, %s653, 127
        %s656 = smul.addr %s655, 8
        %s657 = scalar_lea.vmem %s3, %s656
      $region44: #{conv_bn_layer.3} parent=39 // pred_fallthru
        _
    $region40: #{conv_bn_layer.3} parent=5 // pred_fallthru
      _
  $region6: #{conv_bn_layer.3} parent=0 // loop_footer
    %s13 = sadd.s32 1, %s9
  $region7: #{conv_bn_layer.3} parent=0 // loop_footer_branch
    %8 = sbr.rel target = $region3
  $region8: #{conv_bn_layer.3} parent=0 // loop_exit
    _

// kernel: conv_bn_layer.2
$region0: #{conv_bn_layer.2}
  #allocation0 [shape = 'u32[]', space=smem, size = 0x4, offset = 0x4, fixed_abs, tag = 'smem constant byte address 0x4 - core index']
  #allocation1 [shape = 'u32[144,128]{1,0:T(1,128)}', space=vmem, size = 0x12000, scoped, tag = 'internal scratch']
  %s0 = inlined_call_operand.vmem [shape: f32[1024,128], index: 0, kind: input, shape index: {}]
  %s1 = inlined_call_operand.vmem [shape: f32[128,128], index: 1, kind: input, shape index: {}]
  %s2 = inlined_call_operand.vmem [shape: f32[1024,128], index: 2, kind: output, shape index: {0}]
  %s3 = inlined_call_operand.vmem [shape: f32[8,128], index: 3, kind: output, shape index: {1}]
  %4 = xla_tuple %s2, %s3
  %s5 = sld [smem:[#allocation0]]
  $region53: #{conv_bn_layer.2} parent=0
    _
  %s7 = ssub.s32 1, %s5
  %s8 = scalar_select 0, %s7, %s5
  loop: start=0, step=1, limit=4
  $region2: #{conv_bn_layer.2} parent=0 // loop_pre_header
    _
  $region3: #{conv_bn_layer.2} parent=0 // loop_header
    %s10 = sphi 0, %s14
    %p11 = scmp.ge.s32.totalorder %s10, 4
    %s20 = sphi 0, %s22
    %s23 = sphi 0, %s20
    %s24 = sphi 0, %s23
    %s40 = sphi 0, %s24
    %s44 = sphi 0, %s44
    %s46 = sphi 0, %s44
    %s47 = sphi 0, %s46
    %s61 = sphi 0, %s47
    %s67 = sphi 0, %s69
    %s70 = sphi 0, %s67
    %s71 = sphi 0, %s70
    %s87 = sphi 0, %s71
    %s91 = sphi 0, %s91
    %s93 = sphi 0, %s91
    %s94 = sphi 0, %s93
    %s108 = sphi 0, %s94
  $region4: #{conv_bn_layer.2} parent=0 // loop_header_branch
    %13 = sbr.rel (%p11) target = $region8
  $region5: #{conv_bn_layer.2} parent=0 // loop_body
    %s15 = ssub.s32 %s10, 1
    %s16 = ssub.s32 %s10, 2
    %s17 = sadd.s32 %s10, 1
    %s18 = ssub.s32 %s10, %s17
    %p19 = scmp.eq.s32.totalorder %s18, 0
    %s21 = sadd.s32 %s20, 1
    %s22 = scalar_select %p19, %s20, %s21
    %p25 = pneg %p19
    %p26 = scmp.eq.s32.totalorder %s10, 1
    %p27 = por %p25, %p26
    %p28 = scmp.ne.s32.totalorder %s20, %s23
    %p29 = scmp.eq.s32.totalorder %s10, 0
    %p30 = por %p28, %p29
    %p31 = scmp.ne.s32.totalorder %s20, %s23
    %p32 = scmp.eq.s32.totalorder %s15, 1
    %p33 = por %p31, %p32
    %p34 = scmp.ne.s32.totalorder %s23, %s24
    %p35 = scmp.eq.s32.totalorder %s15, 0
    %p36 = por %p34, %p35
    %p37 = scmp.ne.s32.totalorder %s23, %s24
    %p38 = scmp.eq.s32.totalorder %s16, 1
    %p39 = por %p37, %p38
    %p41 = scmp.ne.s32.totalorder %s24, %s40
    %p42 = scmp.eq.s32.totalorder %s16, 0
    %p43 = por %p41, %p42
    %s45 = sadd.s32 %s44, 1
    %p48 = scmp.eq.s32.totalorder %s10, 1
    %p49 = scmp.ne.s32.totalorder %s44, %s46
    %p50 = scmp.eq.s32.totalorder %s10, 0
    %p51 = por %p49, %p50
    %p52 = scmp.ne.s32.totalorder %s44, %s46
    %p53 = scmp.eq.s32.totalorder %s15, 1
    %p54 = por %p52, %p53
    %p55 = scmp.ne.s32.totalorder %s46, %s47
    %p56 = scmp.eq.s32.totalorder %s15, 0
    %p57 = por %p55, %p56
    %p58 = scmp.ne.s32.totalorder %s46, %s47
    %p59 = scmp.eq.s32.totalorder %s16, 1
    %p60 = por %p58, %p59
    %p62 = scmp.ne.s32.totalorder %s47, %s61
    %p63 = scmp.eq.s32.totalorder %s16, 0
    %p64 = por %p62, %p63
    %s65 = ssub.s32 %s10, %s17
    %p66 = scmp.eq.s32.totalorder %s65, 0
    %s68 = sadd.s32 %s67, 1
    %s69 = scalar_select %p66, %s67, %s68
    %p72 = pneg %p66
    %p73 = scmp.eq.s32.totalorder %s10, 1
    %p74 = por %p72, %p73
    %p75 = scmp.ne.s32.totalorder %s67, %s70
    %p76 = scmp.eq.s32.totalorder %s10, 0
    %p77 = por %p75, %p76
    %p78 = scmp.ne.s32.totalorder %s67, %s70
    %p79 = scmp.eq.s32.totalorder %s15, 1
    %p80 = por %p78, %p79
    %p81 = scmp.ne.s32.totalorder %s70, %s71
    %p82 = scmp.eq.s32.totalorder %s15, 0
    %p83 = por %p81, %p82
    %p84 = scmp.ne.s32.totalorder %s70, %s71
    %p85 = scmp.eq.s32.totalorder %s16, 1
    %p86 = por %p84, %p85
    %p88 = scmp.ne.s32.totalorder %s71, %s87
    %p89 = scmp.eq.s32.totalorder %s16, 0
    %p90 = por %p88, %p89
    %s92 = sadd.s32 %s91, 1
    %p95 = scmp.eq.s32.totalorder %s10, 1
    %p96 = scmp.ne.s32.totalorder %s91, %s93
    %p97 = scmp.eq.s32.totalorder %s10, 0
    %p98 = por %p96, %p97
    %p99 = scmp.ne.s32.totalorder %s91, %s93
    %p100 = scmp.eq.s32.totalorder %s15, 1
    %p101 = por %p99, %p100
    %p102 = scmp.ne.s32.totalorder %s93, %s94
    %p103 = scmp.eq.s32.totalorder %s15, 0
    %p104 = por %p102, %p103
    %p105 = scmp.ne.s32.totalorder %s93, %s94
    %p106 = scmp.eq.s32.totalorder %s16, 1
    %p107 = por %p105, %p106
    %p109 = scmp.ne.s32.totalorder %s94, %s108
    %p110 = scmp.eq.s32.totalorder %s16, 0
    %p111 = por %p109, %p110
    %p112 = scmp.le.s32.totalorder 1, %s10
    %p113 = scmp.lt.s32.totalorder %s10, 3
    %p114 = pnand %p112, %p113
    %p115 = pneg %p114
    // Predicated region
    $region9: #{conv_bn_layer.2} parent=5 // pred_check
      _
    $region10: #{conv_bn_layer.2} parent=5 // pred_check_branch
      %117 = sbr.rel (%p114) target = $region12
    $region11: #{conv_bn_layer.2} parent=5 // pred_region
      %s118 = ssub.s32 %s10, 1
      // Predicated region
      $region13: #{conv_bn_layer.2} parent=11 // pred_check
        %p119 = pneg %p57
      $region14: #{conv_bn_layer.2} parent=11 // pred_check_branch
        %121 = sbr.rel (%p119) target = $region16
      $region15: #{conv_bn_layer.2} parent=11 // pred_region
        _
      $region16: #{conv_bn_layer.2} parent=11 // pred_fallthru
        _
    $region12: #{conv_bn_layer.2} parent=5 // pred_fallthru
      _
    %p122 = scmp.lt.s32.totalorder %s10, 2
    // Predicated region
    $region17: #{conv_bn_layer.2} parent=5 // pred_check
      %p123 = pneg %p122
    $region18: #{conv_bn_layer.2} parent=5 // pred_check_branch
      %125 = sbr.rel (%p123) target = $region20
    $region19: #{conv_bn_layer.2} parent=5 // pred_region
      // Predicated region
      $region21: #{conv_bn_layer.2} parent=19 // pred_check
        %p126 = pneg %p30
      $region22: #{conv_bn_layer.2} parent=19 // pred_check_branch
        %128 = sbr.rel (%p126) target = $region24
      $region23: #{conv_bn_layer.2} parent=19 // pred_region
        %s129 = smul.u32 64, %s10
        %p130 = scmp.lt.s32.totalorder %s129, 127
        %s131 = scalar_select %p130, %s129, 127
        %s132 = smul.addr %s131, 8
        %s133 = scalar_lea.vmem %s0, %s132
        %s134 = smul.u32 64, %s10
      $region24: #{conv_bn_layer.2} parent=19 // pred_fallthru
        _
    $region20: #{conv_bn_layer.2} parent=5 // pred_fallthru
      _
    %p135 = scmp.le.s32.totalorder 1, %s10
    %p136 = scmp.lt.s32.totalorder %s10, 3
    %p137 = pnand %p135, %p136
    %p138 = pneg %p137
    // Predicated region
    $region25: #{conv_bn_layer.2} parent=5 // pred_check
      _
    $region26: #{conv_bn_layer.2} parent=5 // pred_check_branch
      %140 = sbr.rel (%p137) target = $region28
    $region27: #{conv_bn_layer.2} parent=5 // pred_region
      %s141 = ssub.s32 %s10, 1
      %s142 = smul.u32 64, %s15
      %p143 = scmp.lt.s32.totalorder %s142, 127
      %s144 = scalar_select %p143, %s142, 127
      %s145 = smul.addr %s144, 8
      %s146 = scalar_lea.vmem %s0, %s145
      %p147 = pneg %p36
      %p148 = pneg %p33
      %p149 = pneg %p57
      %p150 = pneg %p54
      %p151 = pneg %p83
      %p152 = pneg %p80
      %s153 = smul.u32 64, %s15
      %p154 = scmp.lt.s32.totalorder %s153, 127
      %s155 = scalar_select %p154, %s153, 127
      %s156 = smul.addr %s155, 8
      %s157 = scalar_lea.vmem %s2, %s156
      %p158 = pneg %p104
      %p159 = pneg %p101
      %s160 = smul.u32 64, %s15
      %p161 = scmp.lt.s32.totalorder %s160, 127
      %s162 = scalar_select %p161, %s160, 127
      %s163 = smul.addr %s162, 8
      %s164 = scalar_lea.vmem %s0, %s163
      %s165 = smul.u32 64, %s15
      %s166 = smul.u32 64, %s15
      %p167 = scmp.lt.s32.totalorder %s166, 127
      %s168 = scalar_select %p167, %s166, 127
      %s169 = smul.addr %s168, 8
      %s170 = scalar_lea.vmem %s2, %s169
      %s171 = smul.u32 64, %s15
      %p172 = scmp.eq.s32.totalorder %s15, 0
      // Predicated region
      $region29: #{conv_bn_layer.2} parent=27 // pred_check
        %p173 = pneg %p172
      $region30: #{conv_bn_layer.2} parent=27 // pred_check_branch
        %175 = sbr.rel (%p173) target = $region32
      $region31: #{conv_bn_layer.2} parent=27 // pred_region
        %176 = vst [vmem:[%s3] sm:$0xff] 0.0
      $region32: #{conv_bn_layer.2} parent=27 // pred_fallthru
        _
      %v177 = vld [vmem:[%s164] sm:$0xff]
      %v178 = vld [vmem:[%s164 + $0x8] sm:$0xff]
      %v179 = vld [vmem:[%s164 + $0x10] sm:$0xff]
      %v180 = vld [vmem:[%s164 + $0x18] sm:$0xff]
      %v181 = vld [vmem:[%s164 + $0x20] sm:$0xff]
      %v182 = vld [vmem:[%s164 + $0x28] sm:$0xff]
      %v183 = vld [vmem:[%s164 + $0x30] sm:$0xff]
      %v184 = vld [vmem:[%s164 + $0x38] sm:$0xff]
      %v185 = vld [vmem:[%s164 + $0x40] sm:$0xff]
      %v186 = vld [vmem:[%s164 + $0x48] sm:$0xff]
      %v187 = vld [vmem:[%s164 + $0x50] sm:$0xff]
      %v188 = vld [vmem:[%s164 + $0x58] sm:$0xff]
      %v189 = vld [vmem:[%s164 + $0x60] sm:$0xff]
      %v190 = vld [vmem:[%s164 + $0x68] sm:$0xff]
      %v191 = vld [vmem:[%s164 + $0x70] sm:$0xff]
      %v192 = vld [vmem:[%s164 + $0x78] sm:$0xff]
      %v193 = vld [vmem:[%s164 + $0x80] sm:$0xff]
      %v194 = vld [vmem:[%s164 + $0x88] sm:$0xff]
      %v195 = vld [vmem:[%s164 + $0x90] sm:$0xff]
      %v196 = vld [vmem:[%s164 + $0x98] sm:$0xff]
      %v197 = vld [vmem:[%s164 + $0xa0] sm:$0xff]
      %v198 = vld [vmem:[%s164 + $0xa8] sm:$0xff]
      %v199 = vld [vmem:[%s164 + $0xb0] sm:$0xff]
      %v200 = vld [vmem:[%s164 + $0xb8] sm:$0xff]
      %v201 = vld [vmem:[%s164 + $0xc0] sm:$0xff]
      %v202 = vld [vmem:[%s164 + $0xc8] sm:$0xff]
      %v203 = vld [vmem:[%s164 + $0xd0] sm:$0xff]
      %v204 = vld [vmem:[%s164 + $0xd8] sm:$0xff]
      %v205 = vld [vmem:[%s164 + $0xe0] sm:$0xff]
      %v206 = vld [vmem:[%s164 + $0xe8] sm:$0xff]
      %v207 = vld [vmem:[%s164 + $0xf0] sm:$0xff]
      %v208 = vld [vmem:[%s164 + $0xf8] sm:$0xff]
      %v209 = vld [vmem:[%s164 + $0x100] sm:$0xff]
      %v210 = vld [vmem:[%s164 + $0x108] sm:$0xff]
      %v211 = vld [vmem:[%s164 + $0x110] sm:$0xff]
      %v212 = vld [vmem:[%s164 + $0x118] sm:$0xff]
      %v213 = vld [vmem:[%s164 + $0x120] sm:$0xff]
      %v214 = vld [vmem:[%s164 + $0x128] sm:$0xff]
      %v215 = vld [vmem:[%s164 + $0x130] sm:$0xff]
      %v216 = vld [vmem:[%s164 + $0x138] sm:$0xff]
      %v217 = vld [vmem:[%s164 + $0x140] sm:$0xff]
      %v218 = vld [vmem:[%s164 + $0x148] sm:$0xff]
      %v219 = vld [vmem:[%s164 + $0x150] sm:$0xff]
      %v220 = vld [vmem:[%s164 + $0x158] sm:$0xff]
      %v221 = vld [vmem:[%s164 + $0x160] sm:$0xff]
      %v222 = vld [vmem:[%s164 + $0x168] sm:$0xff]
      %v223 = vld [vmem:[%s164 + $0x170] sm:$0xff]
      %v224 = vld [vmem:[%s164 + $0x178] sm:$0xff]
      %v225 = vld [vmem:[%s164 + $0x180] sm:$0xff]
      %v226 = vld [vmem:[%s164 + $0x188] sm:$0xff]
      %v227 = vld [vmem:[%s164 + $0x190] sm:$0xff]
      %v228 = vld [vmem:[%s164 + $0x198] sm:$0xff]
      %v229 = vld [vmem:[%s164 + $0x1a0] sm:$0xff]
      %v230 = vld [vmem:[%s164 + $0x1a8] sm:$0xff]
      %v231 = vld [vmem:[%s164 + $0x1b0] sm:$0xff]
      %v232 = vld [vmem:[%s164 + $0x1b8] sm:$0xff]
      %v233 = vld [vmem:[%s164 + $0x1c0] sm:$0xff]
      %v234 = vld [vmem:[%s164 + $0x1c8] sm:$0xff]
      %v235 = vld [vmem:[%s164 + $0x1d0] sm:$0xff]
      %v236 = vld [vmem:[%s164 + $0x1d8] sm:$0xff]
      %v237 = vld [vmem:[%s164 + $0x1e0] sm:$0xff]
      %v238 = vld [vmem:[%s164 + $0x1e8] sm:$0xff]
      %v239 = vld [vmem:[%s164 + $0x1f0] sm:$0xff]
      %v240 = vld [vmem:[%s164 + $0x1f8] sm:$0xff]
      %v241 = vld [vmem:[%s1] sm:$0xff]
      %v242 = vld [vmem:[%s1 + $0x8] sm:$0xff]
      %v243 = vld [vmem:[%s1 + $0x10] sm:$0xff]
      %v244 = vld [vmem:[%s1 + $0x18] sm:$0xff]
      %v245 = vld [vmem:[%s1 + $0x20] sm:$0xff]
      %v246 = vld [vmem:[%s1 + $0x28] sm:$0xff]
      %v247 = vld [vmem:[%s1 + $0x30] sm:$0xff]
      %v248 = vld [vmem:[%s1 + $0x38] sm:$0xff]
      %v249 = vld [vmem:[%s1 + $0x40] sm:$0xff]
      %v250 = vld [vmem:[%s1 + $0x48] sm:$0xff]
      %v251 = vld [vmem:[%s1 + $0x50] sm:$0xff]
      %v252 = vld [vmem:[%s1 + $0x58] sm:$0xff]
      %v253 = vld [vmem:[%s1 + $0x60] sm:$0xff]
      %v254 = vld [vmem:[%s1 + $0x68] sm:$0xff]
      %v255 = vld [vmem:[%s1 + $0x70] sm:$0xff]
      %v256 = vld [vmem:[%s1 + $0x78] sm:$0xff]
      %257 = vmatprep.subr.mxu0 0.0
      %258 = vmatpush1.msra.mxu0 %v256
      %259 = vmatprep.subr.mxu0 0.0
      %260 = vmatpush1.msra.mxu0 %v255
      %261 = vmatprep.subr.mxu0 0.0
      %262 = vmatpush1.msra.mxu0 %v254
      %263 = vmatprep.subr.mxu0 0.0
      %264 = vmatpush1.msra.mxu0 %v253
      %265 = vmatprep.subr.mxu0 0.0
      %266 = vmatpush1.msra.mxu0 %v252
      %267 = vmatprep.subr.mxu0 0.0
      %268 = vmatpush1.msra.mxu0 %v251
      %269 = vmatprep.subr.mxu0 0.0
      %270 = vmatpush1.msra.mxu0 %v250
      %271 = vmatprep.subr.mxu0 0.0
      %272 = vmatpush1.msra.mxu0 %v249
      %273 = vmatprep.subr.mxu0 0.0
      %274 = vmatpush1.msra.mxu0 %v248
      %275 = vmatprep.subr.mxu0 0.0
      %276 = vmatpush1.msra.mxu0 %v247
      %277 = vmatprep.subr.mxu0 0.0
      %278 = vmatpush1.msra.mxu0 %v246
      %279 = vmatprep.subr.mxu0 0.0
      %280 = vmatpush1.msra.mxu0 %v245
      %281 = vmatprep.subr.mxu0 0.0
      %282 = vmatpush1.msra.mxu0 %v244
      %283 = vmatprep.subr.mxu0 0.0
      %284 = vmatpush1.msra.mxu0 %v243
      %285 = vmatprep.subr.mxu0 0.0
      %286 = vmatpush1.msra.mxu0 %v242
      %287 = vmatprep.subr.mxu0 0.0
      %288 = vmatpush1.msra.mxu0 %v241
      %289 = vmatprep.subr.mxu0 0.0
      %290 = vmatpush2.msra.mxu0 0.0
      %291 = vmatprep.subr.mxu0 0.0
      %292 = vmatpush2.msra.mxu0 0.0
      %293 = vmatprep.subr.mxu0 0.0
      %294 = vmatpush2.msra.mxu0 0.0
      %295 = vmatprep.subr.mxu0 0.0
      %296 = vmatpush2.msra.mxu0 0.0
      %297 = vmatprep.subr.mxu0 0.0
      %298 = vmatpush2.msra.mxu0 0.0
      %299 = vmatprep.subr.mxu0 0.0
      %300 = vmatpush2.msra.mxu0 0.0
      %301 = vmatprep.subr.mxu0 0.0
      %302 = vmatpush2.msra.mxu0 0.0
      %303 = vmatprep.subr.mxu0 0.0
      %304 = vmatpush2.msra.mxu0 0.0
      %305 = vmatprep.subr.mxu0 0.0
      %306 = vmatpush2.msra.mxu0 0.0
      %307 = vmatprep.subr.mxu0 0.0
      %308 = vmatpush2.msra.mxu0 0.0
      %309 = vmatprep.subr.mxu0 0.0
      %310 = vmatpush2.msra.mxu0 0.0
      %311 = vmatprep.subr.mxu0 0.0
      %312 = vmatpush2.msra.mxu0 0.0
      %313 = vmatprep.subr.mxu0 0.0
      %314 = vmatpush2.msra.mxu0 0.0
      %315 = vmatprep.subr.mxu0 0.0
      %316 = vmatpush2.msra.mxu0 0.0
      %317 = vmatprep.subr.mxu0 0.0
      %318 = vmatpush2.msra.mxu0 0.0
      %319 = vmatprep.subr.mxu0 0.0
      %320 = vmatpush2.msra.mxu0 0.0
      %321 = vmatprep.mubr.f32.mxu0 0.0
      %322 = vmatmul.mubr.f32.gmra.mxu0 %v177
      %v323 = vpop.f32.mrf.mxu0
      %v324 = vadd.f32 0.0, %v323
      %v325 = vpop.f32.mrf.mxu0
      %326 = vmatprep.mubr.f32.mxu0 0.0
      %327 = vmatmul.mubr.f32.gmra.mxu0 %v178
      %v328 = vpop.f32.mrf.mxu0
      %v329 = vadd.f32 0.0, %v328
      %v330 = vpop.f32.mrf.mxu0
      %331 = vmatprep.mubr.f32.mxu0 0.0
      %332 = vmatmul.mubr.f32.gmra.mxu0 %v179
      %v333 = vpop.f32.mrf.mxu0
      %v334 = vadd.f32 0.0, %v333
      %v335 = vpop.f32.mrf.mxu0
      %336 = vmatprep.mubr.f32.mxu0 0.0
      %337 = vmatmul.mubr.f32.gmra.mxu0 %v180
      %v338 = vpop.f32.mrf.mxu0
      %v339 = vadd.f32 0.0, %v338
      %v340 = vpop.f32.mrf.mxu0
      %341 = vmatprep.mubr.f32.mxu0 0.0
      %342 = vmatmul.mubr.f32.gmra.mxu0 %v181
      %v343 = vpop.f32.mrf.mxu0
      %v344 = vadd.f32 0.0, %v343
      %v345 = vpop.f32.mrf.mxu0
      %346 = vmatprep.mubr.f32.mxu0 0.0
      %347 = vmatmul.mubr.f32.gmra.mxu0 %v182
      %v348 = vpop.f32.mrf.mxu0
      %v349 = vadd.f32 0.0, %v348
      %v350 = vpop.f32.mrf.mxu0
      %351 = vmatprep.mubr.f32.mxu0 0.0
      %352 = vmatmul.mubr.f32.gmra.mxu0 %v183
      %v353 = vpop.f32.mrf.mxu0
      %v354 = vadd.f32 0.0, %v353
      %v355 = vpop.f32.mrf.mxu0
      %356 = vmatprep.mubr.f32.mxu0 0.0
      %357 = vmatmul.mubr.f32.gmra.mxu0 %v184
      %v358 = vpop.f32.mrf.mxu0
      %v359 = vadd.f32 0.0, %v358
      %v360 = vpop.f32.mrf.mxu0
      %361 = vmatprep.mubr.f32.mxu0 0.0
      %362 = vmatmul.mubr.f32.gmra.mxu0 %v185
      %v363 = vpop.f32.mrf.mxu0
      %v364 = vadd.f32 0.0, %v363
      %v365 = vpop.f32.mrf.mxu0
      %366 = vmatprep.mubr.f32.mxu0 0.0
      %367 = vmatmul.mubr.f32.gmra.mxu0 %v186
      %v368 = vpop.f32.mrf.mxu0
      %v369 = vadd.f32 0.0, %v368
      %v370 = vpop.f32.mrf.mxu0
      %371 = vmatprep.mubr.f32.mxu0 0.0
      %372 = vmatmul.mubr.f32.gmra.mxu0 %v187
      %v373 = vpop.f32.mrf.mxu0
      %v374 = vadd.f32 0.0, %v373
      %v375 = vpop.f32.mrf.mxu0
      %376 = vmatprep.mubr.f32.mxu0 0.0
      %377 = vmatmul.mubr.f32.gmra.mxu0 %v188
      %v378 = vpop.f32.mrf.mxu0
      %v379 = vadd.f32 0.0, %v378
      %v380 = vpop.f32.mrf.mxu0
      %381 = vmatprep.mubr.f32.mxu0 0.0
      %382 = vmatmul.mubr.f32.gmra.mxu0 %v189
      %v383 = vpop.f32.mrf.mxu0
      %v384 = vadd.f32 0.0, %v383
      %v385 = vpop.f32.mrf.mxu0
      %386 = vmatprep.mubr.f32.mxu0 0.0
      %387 = vmatmul.mubr.f32.gmra.mxu0 %v190
      %v388 = vpop.f32.mrf.mxu0
      %v389 = vadd.f32 0.0, %v388
      %v390 = vpop.f32.mrf.mxu0
      %391 = vmatprep.mubr.f32.mxu0 0.0
      %392 = vmatmul.mubr.f32.gmra.mxu0 %v191
      %v393 = vpop.f32.mrf.mxu0
      %v394 = vadd.f32 0.0, %v393
      %v395 = vpop.f32.mrf.mxu0
      %396 = vmatprep.mubr.f32.mxu0 0.0
      %397 = vmatmul.mubr.f32.gmra.mxu0 %v192
      %v398 = vpop.f32.mrf.mxu0
      %v399 = vadd.f32 0.0, %v398
      %v400 = vpop.f32.mrf.mxu0
      %401 = vmatprep.mubr.f32.mxu0 0.0
      %402 = vmatmul.mubr.f32.gmra.mxu0 %v193
      %v403 = vpop.f32.mrf.mxu0
      %v404 = vadd.f32 0.0, %v403
      %v405 = vpop.f32.mrf.mxu0
      %406 = vmatprep.mubr.f32.mxu0 0.0
      %407 = vmatmul.mubr.f32.gmra.mxu0 %v194
      %v408 = vpop.f32.mrf.mxu0
      %v409 = vadd.f32 0.0, %v408
      %v410 = vpop.f32.mrf.mxu0
      %411 = vmatprep.mubr.f32.mxu0 0.0
      %412 = vmatmul.mubr.f32.gmra.mxu0 %v195
      %v413 = vpop.f32.mrf.mxu0
      %v414 = vadd.f32 0.0, %v413
      %v415 = vpop.f32.mrf.mxu0
      %416 = vmatprep.mubr.f32.mxu0 0.0
      %417 = vmatmul.mubr.f32.gmra.mxu0 %v196
      %v418 = vpop.f32.mrf.mxu0
      %v419 = vadd.f32 0.0, %v418
      %v420 = vpop.f32.mrf.mxu0
      %421 = vmatprep.mubr.f32.mxu0 0.0
      %422 = vmatmul.mubr.f32.gmra.mxu0 %v197
      %v423 = vpop.f32.mrf.mxu0
      %v424 = vadd.f32 0.0, %v423
      %v425 = vpop.f32.mrf.mxu0
      %426 = vmatprep.mubr.f32.mxu0 0.0
      %427 = vmatmul.mubr.f32.gmra.mxu0 %v198
      %v428 = vpop.f32.mrf.mxu0
      %v429 = vadd.f32 0.0, %v428
      %v430 = vpop.f32.mrf.mxu0
      %431 = vmatprep.mubr.f32.mxu0 0.0
      %432 = vmatmul.mubr.f32.gmra.mxu0 %v199
      %v433 = vpop.f32.mrf.mxu0
      %v434 = vadd.f32 0.0, %v433
      %v435 = vpop.f32.mrf.mxu0
      %436 = vmatprep.mubr.f32.mxu0 0.0
      %437 = vmatmul.mubr.f32.gmra.mxu0 %v200
      %v438 = vpop.f32.mrf.mxu0
      %v439 = vadd.f32 0.0, %v438
      %v440 = vpop.f32.mrf.mxu0
      %441 = vmatprep.mubr.f32.mxu0 0.0
      %442 = vmatmul.mubr.f32.gmra.mxu0 %v201
      %v443 = vpop.f32.mrf.mxu0
      %v444 = vadd.f32 0.0, %v443
      %v445 = vpop.f32.mrf.mxu0
      %446 = vmatprep.mubr.f32.mxu0 0.0
      %447 = vmatmul.mubr.f32.gmra.mxu0 %v202
      %v448 = vpop.f32.mrf.mxu0
      %v449 = vadd.f32 0.0, %v448
      %v450 = vpop.f32.mrf.mxu0
      %451 = vmatprep.mubr.f32.mxu0 0.0
      %452 = vmatmul.mubr.f32.gmra.mxu0 %v203
      %v453 = vpop.f32.mrf.mxu0
      %v454 = vadd.f32 0.0, %v453
      %v455 = vpop.f32.mrf.mxu0
      %456 = vmatprep.mubr.f32.mxu0 0.0
      %457 = vmatmul.mubr.f32.gmra.mxu0 %v204
      %v458 = vpop.f32.mrf.mxu0
      %v459 = vadd.f32 0.0, %v458
      %v460 = vpop.f32.mrf.mxu0
      %461 = vmatprep.mubr.f32.mxu0 0.0
      %462 = vmatmul.mubr.f32.gmra.mxu0 %v205
      %v463 = vpop.f32.mrf.mxu0
      %v464 = vadd.f32 0.0, %v463
      %v465 = vpop.f32.mrf.mxu0
      %466 = vmatprep.mubr.f32.mxu0 0.0
      %467 = vmatmul.mubr.f32.gmra.mxu0 %v206
      %v468 = vpop.f32.mrf.mxu0
      %v469 = vadd.f32 0.0, %v468
      %v470 = vpop.f32.mrf.mxu0
      %471 = vmatprep.mubr.f32.mxu0 0.0
      %472 = vmatmul.mubr.f32.gmra.mxu0 %v207
      %v473 = vpop.f32.mrf.mxu0
      %v474 = vadd.f32 0.0, %v473
      %v475 = vpop.f32.mrf.mxu0
      %476 = vmatprep.mubr.f32.mxu0 0.0
      %477 = vmatmul.mubr.f32.gmra.mxu0 %v208
      %v478 = vpop.f32.mrf.mxu0
      %v479 = vadd.f32 0.0, %v478
      %v480 = vpop.f32.mrf.mxu0
      %481 = vmatprep.mubr.f32.mxu0 0.0
      %482 = vmatmul.mubr.f32.gmra.mxu0 %v209
      %v483 = vpop.f32.mrf.mxu0
      %v484 = vadd.f32 0.0, %v483
      %v485 = vpop.f32.mrf.mxu0
      %486 = vmatprep.mubr.f32.mxu0 0.0
      %487 = vmatmul.mubr.f32.gmra.mxu0 %v210
      %v488 = vpop.f32.mrf.mxu0
      %v489 = vadd.f32 0.0, %v488
      %v490 = vpop.f32.mrf.mxu0
      %491 = vmatprep.mubr.f32.mxu0 0.0
      %492 = vmatmul.mubr.f32.gmra.mxu0 %v211
      %v493 = vpop.f32.mrf.mxu0
      %v494 = vadd.f32 0.0, %v493
      %v495 = vpop.f32.mrf.mxu0
      %496 = vmatprep.mubr.f32.mxu0 0.0
      %497 = vmatmul.mubr.f32.gmra.mxu0 %v212
      %v498 = vpop.f32.mrf.mxu0
      %v499 = vadd.f32 0.0, %v498
      %v500 = vpop.f32.mrf.mxu0
      %501 = vmatprep.mubr.f32.mxu0 0.0
      %502 = vmatmul.mubr.f32.gmra.mxu0 %v213
      %v503 = vpop.f32.mrf.mxu0
      %v504 = vadd.f32 0.0, %v503
      %v505 = vpop.f32.mrf.mxu0
      %506 = vmatprep.mubr.f32.mxu0 0.0
      %507 = vmatmul.mubr.f32.gmra.mxu0 %v214
      %v508 = vpop.f32.mrf.mxu0
      %v509 = vadd.f32 0.0, %v508
      %v510 = vpop.f32.mrf.mxu0
      %511 = vmatprep.mubr.f32.mxu0 0.0
      %512 = vmatmul.mubr.f32.gmra.mxu0 %v215
      %v513 = vpop.f32.mrf.mxu0
      %v514 = vadd.f32 0.0, %v513
      %v515 = vpop.f32.mrf.mxu0
      %516 = vmatprep.mubr.f32.mxu0 0.0
      %517 = vmatmul.mubr.f32.gmra.mxu0 %v216
      %v518 = vpop.f32.mrf.mxu0
      %v519 = vadd.f32 0.0, %v518
      %v520 = vpop.f32.mrf.mxu0
      %521 = vmatprep.mubr.f32.mxu0 0.0
      %522 = vmatmul.mubr.f32.gmra.mxu0 %v217
      %v523 = vpop.f32.mrf.mxu0
      %v524 = vadd.f32 0.0, %v523
      %v525 = vpop.f32.mrf.mxu0
      %526 = vmatprep.mubr.f32.mxu0 0.0
      %527 = vmatmul.mubr.f32.gmra.mxu0 %v218
      %v528 = vpop.f32.mrf.mxu0
      %v529 = vadd.f32 0.0, %v528
      %v530 = vpop.f32.mrf.mxu0
      %531 = vmatprep.mubr.f32.mxu0 0.0
      %532 = vmatmul.mubr.f32.gmra.mxu0 %v219
      %v533 = vpop.f32.mrf.mxu0
      %v534 = vadd.f32 0.0, %v533
      %v535 = vpop.f32.mrf.mxu0
      %536 = vmatprep.mubr.f32.mxu0 0.0
      %537 = vmatmul.mubr.f32.gmra.mxu0 %v220
      %v538 = vpop.f32.mrf.mxu0
      %v539 = vadd.f32 0.0, %v538
      %v540 = vpop.f32.mrf.mxu0
      %541 = vmatprep.mubr.f32.mxu0 0.0
      %542 = vmatmul.mubr.f32.gmra.mxu0 %v221
      %v543 = vpop.f32.mrf.mxu0
      %v544 = vadd.f32 0.0, %v543
      %v545 = vpop.f32.mrf.mxu0
      %546 = vmatprep.mubr.f32.mxu0 0.0
      %547 = vmatmul.mubr.f32.gmra.mxu0 %v222
      %v548 = vpop.f32.mrf.mxu0
      %v549 = vadd.f32 0.0, %v548
      %v550 = vpop.f32.mrf.mxu0
      %551 = vmatprep.mubr.f32.mxu0 0.0
      %552 = vmatmul.mubr.f32.gmra.mxu0 %v223
      %v553 = vpop.f32.mrf.mxu0
      %v554 = vadd.f32 0.0, %v553
      %v555 = vpop.f32.mrf.mxu0
      %556 = vmatprep.mubr.f32.mxu0 0.0
      %557 = vmatmul.mubr.f32.gmra.mxu0 %v224
      %v558 = vpop.f32.mrf.mxu0
      %v559 = vadd.f32 0.0, %v558
      %v560 = vpop.f32.mrf.mxu0
      %561 = vmatprep.mubr.f32.mxu0 0.0
      %562 = vmatmul.mubr.f32.gmra.mxu0 %v225
      %v563 = vpop.f32.mrf.mxu0
      %v564 = vadd.f32 0.0, %v563
      %v565 = vpop.f32.mrf.mxu0
      %566 = vmatprep.mubr.f32.mxu0 0.0
      %567 = vmatmul.mubr.f32.gmra.mxu0 %v226
      %v568 = vpop.f32.mrf.mxu0
      %v569 = vadd.f32 0.0, %v568
      %v570 = vpop.f32.mrf.mxu0
      %571 = vmatprep.mubr.f32.mxu0 0.0
      %572 = vmatmul.mubr.f32.gmra.mxu0 %v227
      %v573 = vpop.f32.mrf.mxu0
      %v574 = vadd.f32 0.0, %v573
      %v575 = vpop.f32.mrf.mxu0
      %576 = vmatprep.mubr.f32.mxu0 0.0
      %577 = vmatmul.mubr.f32.gmra.mxu0 %v228
      %v578 = vpop.f32.mrf.mxu0
      %v579 = vadd.f32 0.0, %v578
      %v580 = vpop.f32.mrf.mxu0
      %581 = vmatprep.mubr.f32.mxu0 0.0
      %582 = vmatmul.mubr.f32.gmra.mxu0 %v229
      %v583 = vpop.f32.mrf.mxu0
      %v584 = vadd.f32 0.0, %v583
      %v585 = vpop.f32.mrf.mxu0
      %586 = vmatprep.mubr.f32.mxu0 0.0
      %587 = vmatmul.mubr.f32.gmra.mxu0 %v230
      %v588 = vpop.f32.mrf.mxu0
      %v589 = vadd.f32 0.0, %v588
      %v590 = vpop.f32.mrf.mxu0
      %591 = vmatprep.mubr.f32.mxu0 0.0
      %592 = vmatmul.mubr.f32.gmra.mxu0 %v231
      %v593 = vpop.f32.mrf.mxu0
      %v594 = vadd.f32 0.0, %v593
      %v595 = vpop.f32.mrf.mxu0
      %596 = vmatprep.mubr.f32.mxu0 0.0
      %597 = vmatmul.mubr.f32.gmra.mxu0 %v232
      %v598 = vpop.f32.mrf.mxu0
      %v599 = vadd.f32 0.0, %v598
      %v600 = vpop.f32.mrf.mxu0
      %601 = vmatprep.mubr.f32.mxu0 0.0
      %602 = vmatmul.mubr.f32.gmra.mxu0 %v233
      %v603 = vpop.f32.mrf.mxu0
      %v604 = vadd.f32 0.0, %v603
      %v605 = vpop.f32.mrf.mxu0
      %606 = vmatprep.mubr.f32.mxu0 0.0
      %607 = vmatmul.mubr.f32.gmra.mxu0 %v234
      %v608 = vpop.f32.mrf.mxu0
      %v609 = vadd.f32 0.0, %v608
      %v610 = vpop.f32.mrf.mxu0
      %611 = vmatprep.mubr.f32.mxu0 0.0
      %612 = vmatmul.mubr.f32.gmra.mxu0 %v235
      %v613 = vpop.f32.mrf.mxu0
      %v614 = vadd.f32 0.0, %v613
      %v615 = vpop.f32.mrf.mxu0
      %616 = vmatprep.mubr.f32.mxu0 0.0
      %617 = vmatmul.mubr.f32.gmra.mxu0 %v236
      %v618 = vpop.f32.mrf.mxu0
      %v619 = vadd.f32 0.0, %v618
      %v620 = vpop.f32.mrf.mxu0
      %621 = vmatprep.mubr.f32.mxu0 0.0
      %622 = vmatmul.mubr.f32.gmra.mxu0 %v237
      %v623 = vpop.f32.mrf.mxu0
      %v624 = vadd.f32 0.0, %v623
      %v625 = vpop.f32.mrf.mxu0
      %626 = vmatprep.mubr.f32.mxu0 0.0
      %627 = vmatmul.mubr.f32.gmra.mxu0 %v238
      %v628 = vpop.f32.mrf.mxu0
      %v629 = vadd.f32 0.0, %v628
      %v630 = vpop.f32.mrf.mxu0
      %631 = vmatprep.mubr.f32.mxu0 0.0
      %632 = vmatmul.mubr.f32.gmra.mxu0 %v239
      %v633 = vpop.f32.mrf.mxu0
      %v634 = vadd.f32 0.0, %v633
      %v635 = vpop.f32.mrf.mxu0
      %636 = vmatprep.mubr.f32.mxu0 0.0
      %637 = vmatmul.mubr.f32.gmra.mxu0 %v240
      %v638 = vpop.f32.mrf.mxu0
      %v639 = vadd.f32 0.0, %v638
      %v640 = vpop.f32.mrf.mxu0
      %641 = vdwg.mxu0
      %642 = vst [vmem:[%s170] sm:$0xff] %v324
      %643 = vst [vmem:[%s170 + $0x8] sm:$0xff] %v329
      %644 = vst [vmem:[%s170 + $0x10] sm:$0xff] %v334
      %645 = vst [vmem:[%s170 + $0x18] sm:$0xff] %v339
      %646 = vst [vmem:[%s170 + $0x20] sm:$0xff] %v344
      %647 = vst [vmem:[%s170 + $0x28] sm:$0xff] %v349
      %648 = vst [vmem:[%s170 + $0x30] sm:$0xff] %v354
      %649 = vst [vmem:[%s170 + $0x38] sm:$0xff] %v359
      %650 = vst [vmem:[%s170 + $0x40] sm:$0xff] %v364
      %651 = vst [vmem:[%s170 + $0x48] sm:$0xff] %v369
      %652 = vst [vmem:[%s170 + $0x50] sm:$0xff] %v374
      %653 = vst [vmem:[%s170 + $0x58] sm:$0xff] %v379
      %654 = vst [vmem:[%s170 + $0x60] sm:$0xff] %v384
      %655 = vst [vmem:[%s170 + $0x68] sm:$0xff] %v389
      %656 = vst [vmem:[%s170 + $0x70] sm:$0xff] %v394
      %657 = vst [vmem:[%s170 + $0x78] sm:$0xff] %v399
      %658 = vst [vmem:[%s170 + $0x80] sm:$0xff] %v404
      %659 = vst [vmem:[%s170 + $0x88] sm:$0xff] %v409
      %660 = vst [vmem:[%s170 + $0x90] sm:$0xff] %v414
      %661 = vst [vmem:[%s170 + $0x98] sm:$0xff] %v419
      %662 = vst [vmem:[%s170 + $0xa0] sm:$0xff] %v424
      %663 = vst [vmem:[%s170 + $0xa8] sm:$0xff] %v429
      %664 = vst [vmem:[%s170 + $0xb0] sm:$0xff] %v434
      %665 = vst [vmem:[%s170 + $0xb8] sm:$0xff] %v439
      %666 = vst [vmem:[%s170 + $0xc0] sm:$0xff] %v444
      %667 = vst [vmem:[%s170 + $0xc8] sm:$0xff] %v449
      %668 = vst [vmem:[%s170 + $0xd0] sm:$0xff] %v454
      %669 = vst [vmem:[%s170 + $0xd8] sm:$0xff] %v459
      %670 = vst [vmem:[%s170 + $0xe0] sm:$0xff] %v464
      %671 = vst [vmem:[%s170 + $0xe8] sm:$0xff] %v469
      %672 = vst [vmem:[%s170 + $0xf0] sm:$0xff] %v474
      %673 = vst [vmem:[%s170 + $0xf8] sm:$0xff] %v479
      %674 = vst [vmem:[%s170 + $0x100] sm:$0xff] %v484
      %675 = vst [vmem:[%s170 + $0x108] sm:$0xff] %v489
      %676 = vst [vmem:[%s170 + $0x110] sm:$0xff] %v494
      %677 = vst [vmem:[%s170 + $0x118] sm:$0xff] %v499
      %678 = vst [vmem:[%s170 + $0x120] sm:$0xff] %v504
      %679 = vst [vmem:[%s170 + $0x128] sm:$0xff] %v509
      %680 = vst [vmem:[%s170 + $0x130] sm:$0xff] %v514
      %681 = vst [vmem:[%s170 + $0x138] sm:$0xff] %v519
      %682 = vst [vmem:[%s170 + $0x140] sm:$0xff] %v524
      %683 = vst [vmem:[%s170 + $0x148] sm:$0xff] %v529
      %684 = vst [vmem:[%s170 + $0x150] sm:$0xff] %v534
      %685 = vst [vmem:[%s170 + $0x158] sm:$0xff] %v539
      %686 = vst [vmem:[%s170 + $0x160] sm:$0xff] %v544
      %687 = vst [vmem:[%s170 + $0x168] sm:$0xff] %v549
      %688 = vst [vmem:[%s170 + $0x170] sm:$0xff] %v554
      %689 = vst [vmem:[%s170 + $0x178] sm:$0xff] %v559
      %690 = vst [vmem:[%s170 + $0x180] sm:$0xff] %v564
      %691 = vst [vmem:[%s170 + $0x188] sm:$0xff] %v569
      %692 = vst [vmem:[%s170 + $0x190] sm:$0xff] %v574
      %693 = vst [vmem:[%s170 + $0x198] sm:$0xff] %v579
      %694 = vst [vmem:[%s170 + $0x1a0] sm:$0xff] %v584
      %695 = vst [vmem:[%s170 + $0x1a8] sm:$0xff] %v589
      %696 = vst [vmem:[%s170 + $0x1b0] sm:$0xff] %v594
      %697 = vst [vmem:[%s170 + $0x1b8] sm:$0xff] %v599
      %698 = vst [vmem:[%s170 + $0x1c0] sm:$0xff] %v604
      %699 = vst [vmem:[%s170 + $0x1c8] sm:$0xff] %v609
      %700 = vst [vmem:[%s170 + $0x1d0] sm:$0xff] %v614
      %701 = vst [vmem:[%s170 + $0x1d8] sm:$0xff] %v619
      %702 = vst [vmem:[%s170 + $0x1e0] sm:$0xff] %v624
      %703 = vst [vmem:[%s170 + $0x1e8] sm:$0xff] %v629
      %704 = vst [vmem:[%s170 + $0x1f0] sm:$0xff] %v634
      %705 = vst [vmem:[%s170 + $0x1f8] sm:$0xff] %v639
      %v706 = vld [vmem:[%s3] sm:$0x1]
      %v707 = vadd.f32 %v324, %v329
      %v708 = vadd.f32 %v707, %v334
      %v709 = vadd.f32 %v708, %v339
      %v710 = vadd.f32 %v709, %v344
      %v711 = vadd.f32 %v710, %v349
      %v712 = vadd.f32 %v711, %v354
      %v713 = vadd.f32 %v712, %v359
      %v714 = vadd.f32 %v713, %v364
      %v715 = vadd.f32 %v714, %v369
      %v716 = vadd.f32 %v715, %v374
      %v717 = vadd.f32 %v716, %v379
      %v718 = vadd.f32 %v717, %v384
      %v719 = vadd.f32 %v718, %v389
      %v720 = vadd.f32 %v719, %v394
      %v721 = vadd.f32 %v720, %v399
      %v722 = vadd.f32 %v721, %v404
      %v723 = vadd.f32 %v722, %v409
      %v724 = vadd.f32 %v723, %v414
      %v725 = vadd.f32 %v724, %v419
      %v726 = vadd.f32 %v725, %v424
      %v727 = vadd.f32 %v726, %v429
      %v728 = vadd.f32 %v727, %v434
      %v729 = vadd.f32 %v728, %v439
      %v730 = vadd.f32 %v729, %v444
      %v731 = vadd.f32 %v730, %v449
      %v732 = vadd.f32 %v731, %v454
      %v733 = vadd.f32 %v732, %v459
      %v734 = vadd.f32 %v733, %v464
      %v735 = vadd.f32 %v734, %v469
      %v736 = vadd.f32 %v735, %v474
      %v737 = vadd.f32 %v736, %v479
      %v738 = vadd.f32 %v737, %v484
      %v739 = vadd.f32 %v738, %v489
      %v740 = vadd.f32 %v739, %v494
      %v741 = vadd.f32 %v740, %v499
      %v742 = vadd.f32 %v741, %v504
      %v743 = vadd.f32 %v742, %v509
      %v744 = vadd.f32 %v743, %v514
      %v745 = vadd.f32 %v744, %v519
      %v746 = vadd.f32 %v745, %v524
      %v747 = vadd.f32 %v746, %v529
      %v748 = vadd.f32 %v747, %v534
      %v749 = vadd.f32 %v748, %v539
      %v750 = vadd.f32 %v749, %v544
      %v751 = vadd.f32 %v750, %v549
      %v752 = vadd.f32 %v751, %v554
      %v753 = vadd.f32 %v752, %v559
      %v754 = vadd.f32 %v753, %v564
      %v755 = vadd.f32 %v754, %v569
      %v756 = vadd.f32 %v755, %v574
      %v757 = vadd.f32 %v756, %v579
      %v758 = vadd.f32 %v757, %v584
      %v759 = vadd.f32 %v758, %v589
      %v760 = vadd.f32 %v759, %v594
      %v761 = vadd.f32 %v760, %v599
      %v762 = vadd.f32 %v761, %v604
      %v763 = vadd.f32 %v762, %v609
      %v764 = vadd.f32 %v763, %v614
      %v765 = vadd.f32 %v764, %v619
      %v766 = vadd.f32 %v765, %v624
      %v767 = vadd.f32 %v766, %v629
      %v768 = vadd.f32 %v767, %v634
      %v769 = vadd.f32 %v768, %v639
      %v770 = vrot.slane %v769, 4
      %v771 = vadd.f32 %v769, %v770
      %v772 = vrot.slane %v771, 2
      %v773 = vadd.f32 %v771, %v772
      %v774 = vrot.slane %v773, 1
      %v775 = vadd.f32 %v773, %v774
      %v776 = vadd.f32 %v706, %v775
      %777 = vst [vmem:[%s3] sm:$0x1] %v776
      %v778 = vld [vmem:[%s3 + $0x1] sm:$0x1]
      %v779 = vmul.f32 %v324, %v324
      %v780 = vmul.f32 %v329, %v329
      %v781 = vmul.f32 %v334, %v334
      %v782 = vmul.f32 %v339, %v339
      %v783 = vmul.f32 %v344, %v344
      %v784 = vmul.f32 %v349, %v349
      %v785 = vmul.f32 %v354, %v354
      %v786 = vmul.f32 %v359, %v359
      %v787 = vmul.f32 %v364, %v364
      %v788 = vmul.f32 %v369, %v369
      %v789 = vmul.f32 %v374, %v374
      %v790 = vmul.f32 %v379, %v379
      %v791 = vmul.f32 %v384, %v384
      %v792 = vmul.f32 %v389, %v389
      %v793 = vmul.f32 %v394, %v394
      %v794 = vmul.f32 %v399, %v399
      %v795 = vmul.f32 %v404, %v404
      %v796 = vmul.f32 %v409, %v409
      %v797 = vmul.f32 %v414, %v414
      %v798 = vmul.f32 %v419, %v419
      %v799 = vmul.f32 %v424, %v424
      %v800 = vmul.f32 %v429, %v429
      %v801 = vmul.f32 %v434, %v434
      %v802 = vmul.f32 %v439, %v439
      %v803 = vmul.f32 %v444, %v444
      %v804 = vmul.f32 %v449, %v449
      %v805 = vmul.f32 %v454, %v454
      %v806 = vmul.f32 %v459, %v459
      %v807 = vmul.f32 %v464, %v464
      %v808 = vmul.f32 %v469, %v469
      %v809 = vmul.f32 %v474, %v474
      %v810 = vmul.f32 %v479, %v479
      %v811 = vmul.f32 %v484, %v484
      %v812 = vmul.f32 %v489, %v489
      %v813 = vmul.f32 %v494, %v494
      %v814 = vmul.f32 %v499, %v499
      %v815 = vmul.f32 %v504, %v504
      %v816 = vmul.f32 %v509, %v509
      %v817 = vmul.f32 %v514, %v514
      %v818 = vmul.f32 %v519, %v519
      %v819 = vmul.f32 %v524, %v524
      %v820 = vmul.f32 %v529, %v529
      %v821 = vmul.f32 %v534, %v534
      %v822 = vmul.f32 %v539, %v539
      %v823 = vmul.f32 %v544, %v544
      %v824 = vmul.f32 %v549, %v549
      %v825 = vmul.f32 %v554, %v554
      %v826 = vmul.f32 %v559, %v559
      %v827 = vmul.f32 %v564, %v564
      %v828 = vmul.f32 %v569, %v569
      %v829 = vmul.f32 %v574, %v574
      %v830 = vmul.f32 %v579, %v579
      %v831 = vmul.f32 %v584, %v584
      %v832 = vmul.f32 %v589, %v589
      %v833 = vmul.f32 %v594, %v594
      %v834 = vmul.f32 %v599, %v599
      %v835 = vmul.f32 %v604, %v604
      %v836 = vmul.f32 %v609, %v609
      %v837 = vmul.f32 %v614, %v614
      %v838 = vmul.f32 %v619, %v619
      %v839 = vmul.f32 %v624, %v624
      %v840 = vmul.f32 %v629, %v629
      %v841 = vmul.f32 %v634, %v634
      %v842 = vmul.f32 %v639, %v639
      %v843 = vadd.f32 %v779, %v780
      %v844 = vadd.f32 %v843, %v781
      %v845 = vadd.f32 %v844, %v782
      %v846 = vadd.f32 %v845, %v783
      %v847 = vadd.f32 %v846, %v784
      %v848 = vadd.f32 %v847, %v785
      %v849 = vadd.f32 %v848, %v786
      %v850 = vadd.f32 %v849, %v787
      %v851 = vadd.f32 %v850, %v788
      %v852 = vadd.f32 %v851, %v789
      %v853 = vadd.f32 %v852, %v790
      %v854 = vadd.f32 %v853, %v791
      %v855 = vadd.f32 %v854, %v792
      %v856 = vadd.f32 %v855, %v793
      %v857 = vadd.f32 %v856, %v794
      %v858 = vadd.f32 %v857, %v795
      %v859 = vadd.f32 %v858, %v796
      %v860 = vadd.f32 %v859, %v797
      %v861 = vadd.f32 %v860, %v798
      %v862 = vadd.f32 %v861, %v799
      %v863 = vadd.f32 %v862, %v800
      %v864 = vadd.f32 %v863, %v801
      %v865 = vadd.f32 %v864, %v802
      %v866 = vadd.f32 %v865, %v803
      %v867 = vadd.f32 %v866, %v804
      %v868 = vadd.f32 %v867, %v805
      %v869 = vadd.f32 %v868, %v806
      %v870 = vadd.f32 %v869, %v807
      %v871 = vadd.f32 %v870, %v808
      %v872 = vadd.f32 %v871, %v809
      %v873 = vadd.f32 %v872, %v810
      %v874 = vadd.f32 %v873, %v811
      %v875 = vadd.f32 %v874, %v812
      %v876 = vadd.f32 %v875, %v813
      %v877 = vadd.f32 %v876, %v814
      %v878 = vadd.f32 %v877, %v815
      %v879 = vadd.f32 %v878, %v816
      %v880 = vadd.f32 %v879, %v817
      %v881 = vadd.f32 %v880, %v818
      %v882 = vadd.f32 %v881, %v819
      %v883 = vadd.f32 %v882, %v820
      %v884 = vadd.f32 %v883, %v821
      %v885 = vadd.f32 %v884, %v822
      %v886 = vadd.f32 %v885, %v823
      %v887 = vadd.f32 %v886, %v824
      %v888 = vadd.f32 %v887, %v825
      %v889 = vadd.f32 %v888, %v826
      %v890 = vadd.f32 %v889, %v827
      %v891 = vadd.f32 %v890, %v828
      %v892 = vadd.f32 %v891, %v829
      %v893 = vadd.f32 %v892, %v830
      %v894 = vadd.f32 %v893, %v831
      %v895 = vadd.f32 %v894, %v832
      %v896 = vadd.f32 %v895, %v833
      %v897 = vadd.f32 %v896, %v834
      %v898 = vadd.f32 %v897, %v835
      %v899 = vadd.f32 %v898, %v836
      %v900 = vadd.f32 %v899, %v837
      %v901 = vadd.f32 %v900, %v838
      %v902 = vadd.f32 %v901, %v839
      %v903 = vadd.f32 %v902, %v840
      %v904 = vadd.f32 %v903, %v841
      %v905 = vadd.f32 %v904, %v842
      %v906 = vrot.slane %v905, 4
      %v907 = vadd.f32 %v905, %v906
      %v908 = vrot.slane %v907, 2
      %v909 = vadd.f32 %v907, %v908
      %v910 = vrot.slane %v909, 1
      %v911 = vadd.f32 %v909, %v910
      %v912 = vadd.f32 %v778, %v911
      %913 = vst [vmem:[%s3 + $0x1] sm:$0x1] %v912
      %s914 = smul.u32 64, %s15
      %p915 = scmp.lt.s32.totalorder %s914, 127
      %s916 = scalar_select %p915, %s914, 127
      %s917 = smul.addr %s916, 8
      %s918 = scalar_lea.vmem %s2, %s917
      // Predicated region
      $region33: #{conv_bn_layer.2} parent=27 // pred_check
        %p919 = pneg %p80
      $region34: #{conv_bn_layer.2} parent=27 // pred_check_branch
        %921 = sbr.rel (%p919) target = $region36
      $region35: #{conv_bn_layer.2} parent=27 // pred_region
        %s922 = smul.u32 64, %s15
      $region36: #{conv_bn_layer.2} parent=27 // pred_fallthru
        _
      // Predicated region
      $region37: #{conv_bn_layer.2} parent=27 // pred_check
        %p923 = pneg %p101
      $region38: #{conv_bn_layer.2} parent=27 // pred_check_branch
        %925 = sbr.rel (%p923) target = $region40
      $region39: #{conv_bn_layer.2} parent=27 // pred_region
        _
      $region40: #{conv_bn_layer.2} parent=27 // pred_fallthru
        _
      // Predicated region
      $region41: #{conv_bn_layer.2} parent=27 // pred_check
        %p926 = pneg %p101
      $region42: #{conv_bn_layer.2} parent=27 // pred_check_branch
        %928 = sbr.rel (%p926) target = $region44
      $region43: #{conv_bn_layer.2} parent=27 // pred_region
        _
      $region44: #{conv_bn_layer.2} parent=27 // pred_fallthru
        _
    $region28: #{conv_bn_layer.2} parent=5 // pred_fallthru
      _
    %p929 = scmp.le.s32.totalorder 2, %s10
    // Predicated region
    $region45: #{conv_bn_layer.2} parent=5 // pred_check
      %p930 = pneg %p929
    $region46: #{conv_bn_layer.2} parent=5 // pred_check_branch
      %932 = sbr.rel (%p930) target = $region48
    $region47: #{conv_bn_layer.2} parent=5 // pred_region
      %s933 = ssub.s32 %s10, 2
      // Predicated region
      $region49: #{conv_bn_layer.2} parent=47 // pred_check
        %p934 = pneg %p86
      $region50: #{conv_bn_layer.2} parent=47 // pred_check_branch
        %936 = sbr.rel (%p934) target = $region52
      $region51: #{conv_bn_layer.2} parent=47 // pred_region
        %s937 = smul.u32 64, %s16
        %p938 = scmp.lt.s32.totalorder %s937, 127
        %s939 = scalar_select %p938, %s937, 127
        %s940 = smul.addr %s939, 8
        %s941 = scalar_lea.vmem %s2, %s940
      $region52: #{conv_bn_layer.2} parent=47 // pred_fallthru
        _
    $region48: #{conv_bn_layer.2} parent=5 // pred_fallthru
      _
  $region6: #{conv_bn_layer.2} parent=0 // loop_footer
    %s14 = sadd.s32 1, %s10
  $region7: #{conv_bn_layer.2} parent=0 // loop_footer_branch
    %9 = sbr.rel target = $region3
  $region8: #{conv_bn_layer.2} parent=0 // loop_exit
    _

</llo_original>
